<compile_context>
chip_gen: v7x
topology: tpu7x:2x2x1
jax: 0.10.0
libtpu: 0.0.40
codegen_flags: <defaults>
</compile_context>

<pallas_src>
import functools
import numpy as np
import jax
import jax.numpy as jnp
from jax import lax
from jax.experimental import pallas as pl
from jax.experimental.pallas import tpu as pltpu

# ----------------------- synthetic config (small shapes) -----------------------
CLASS_NAMES = ["Car", "Pedestrian", "Cyclist"]
NUM_CLASS = len(CLASS_NAMES)
CODE_SIZE = 7                      # ResidualCoder.code_size
NUM_DIR_BINS = 2
DIR_OFFSET = 0.78539
DIR_LIMIT_OFFSET = 0.0
INPUT_CHANNELS = 32
BATCH = 2
FMAP_H = 16                        # ny
FMAP_W = 16                        # nx
PC_RANGE = np.array([0.0, -25.6, -3.0, 51.2, 25.6, 1.0], dtype=np.float64)
VOXEL_SIZE = np.array([0.2, 0.2, 4.0], dtype=np.float64)
FEATURE_MAP_STRIDE = 16            # 256 / 16 = 16 -> feature map 16 x 16

ANCHOR_GENERATOR_CFG = [
    dict(anchor_sizes=[[3.9, 1.6, 1.56]], anchor_rotations=[0.0, 1.57],
         anchor_bottom_heights=[-1.78], feature_map_stride=FEATURE_MAP_STRIDE),
    dict(anchor_sizes=[[0.8, 0.6, 1.73]], anchor_rotations=[0.0, 1.57],
         anchor_bottom_heights=[-0.6], feature_map_stride=FEATURE_MAP_STRIDE),
    dict(anchor_sizes=[[1.76, 0.6, 1.73]], anchor_rotations=[0.0, 1.57],
         anchor_bottom_heights=[-0.6], feature_map_stride=FEATURE_MAP_STRIDE),
]


# ----------------------- anchor generation (host-side constant setup) ----------
# TODO(synk): AnchorGenerator / ResidualCoder class plumbing is constant setup,
# done here in NumPy; only the anchor values matter for the forward pass.
def generate_anchors(cfg_list, grid_size, pc_range):
    anchors_list, num_per_loc = [], []
    for cfg in cfg_list:
        nx = int(grid_size[0] // cfg["feature_map_stride"])
        ny = int(grid_size[1] // cfg["feature_map_stride"])
        sizes = np.array(cfg["anchor_sizes"], dtype=np.float64)
        rots = np.array(cfg["anchor_rotations"], dtype=np.float64)
        heights = np.array(cfg["anchor_bottom_heights"], dtype=np.float64)
        num_per_loc.append(len(sizes) * len(rots) * len(heights))

        x_stride = (pc_range[3] - pc_range[0]) / (nx - 1)
        y_stride = (pc_range[4] - pc_range[1]) / (ny - 1)
        x_shifts = pc_range[0] + np.arange(nx, dtype=np.float64) * x_stride
        y_shifts = pc_range[1] + np.arange(ny, dtype=np.float64) * y_stride
        z_shifts = heights

        xg, yg, zg = np.meshgrid(x_shifts, y_shifts, z_shifts, indexing="ij")
        anchors = np.stack([xg, yg, zg], axis=-1)                              # (nx, ny, nz, 3)
        ns, nr, nz = sizes.shape[0], rots.shape[0], z_shifts.shape[0]
        anchors = np.tile(anchors[:, :, :, None, :], (1, 1, 1, ns, 1))
        size_rep = np.tile(sizes.reshape(1, 1, 1, ns, 3), (nx, ny, nz, 1, 1))
        anchors = np.concatenate([anchors, size_rep], axis=-1)
        anchors = np.tile(anchors[:, :, :, :, None, :], (1, 1, 1, 1, nr, 1))
        rot_rep = np.tile(rots.reshape(1, 1, 1, 1, nr, 1), (nx, ny, nz, ns, 1, 1))
        anchors = np.concatenate([anchors, rot_rep], axis=-1)                  # (nx, ny, nz, ns, nr, 7)
        anchors = np.transpose(anchors, (2, 1, 0, 3, 4, 5))                    # (nz, ny, nx, ns, nr, 7)
        anchors[..., 2] += anchors[..., 5] / 2.0                               # bottom -> center z
        anchors_list.append(anchors.astype(np.float32))
    return anchors_list, num_per_loc


GRID_SIZE = (PC_RANGE[3:] - PC_RANGE[:3]) / VOXEL_SIZE
_anchors_list, _num_per_loc = generate_anchors(ANCHOR_GENERATOR_CFG, GRID_SIZE, PC_RANGE)
NUM_ANCHORS_PER_LOC = int(sum(_num_per_loc))                      # 6
_anchors_cat = np.concatenate(_anchors_list, axis=-3)             # (1, ny, nx, 3, 2, 7)
ANCHORS_FLAT = _anchors_cat.reshape(-1, CODE_SIZE).astype(np.float32)  # (A, 7), a = loc*6 + k
NUM_ANCHORS = ANCHORS_FLAT.shape[0]
HW = FMAP_H * FMAP_W
assert NUM_ANCHORS == HW * NUM_ANCHORS_PER_LOC
assert NUM_DIR_BINS == 2   # the fused dir-difference column assumes 2 bins

PERIOD = float(2.0 * np.pi / NUM_DIR_BINS)
INV_PERIOD = float(1.0 / PERIOD)

# Fused head lane layout.
N_CLS = NUM_ANCHORS_PER_LOC * NUM_CLASS        # 18
N_BOX = NUM_ANCHORS_PER_LOC * CODE_SIZE        # 42
N_DIR = NUM_ANCHORS_PER_LOC * NUM_DIR_BINS     # 12
CLS_OFF = 0
BOX_OFF = N_CLS                                # 18
DIR_OFF = N_CLS + N_BOX                        # 60
MAIN_W = 128                                   # main block (lane padded)
FULL_W = 256                                   # main + shift block
assert DIR_OFF + N_DIR <= MAIN_W
ROT_LANES = BOX_OFF + np.arange(NUM_ANCHORS_PER_LOC) * CODE_SIZE + 6   # rotation lanes


# ----------------------- host-side decode tables (anchors -> per-lane constants) ----
def build_decode_tables(anchors_flat):
    """SCALE/OFFSET per (location row, lane) and per-lane masks, so the in-kernel
    ResidualCoder decode is: where(exp_lane, exp(y)*scale, y*scale + offset)."""
    anc = anchors_flat.reshape(HW, NUM_ANCHORS_PER_LOC, CODE_SIZE).astype(np.float64)
    scale = np.ones((HW, MAIN_W), np.float64)
    offset = np.zeros((HW, MAIN_W), np.float64)
    is_exp = np.zeros((MAIN_W,), np.float32)
    is_rot = np.zeros((MAIN_W,), np.float32)
    for k in range(NUM_ANCHORS_PER_LOC):
        xa, ya, za = anc[:, k, 0], anc[:, k, 1], anc[:, k, 2]
        dxa, dya, dza, ra = anc[:, k, 3], anc[:, k, 4], anc[:, k, 5], anc[:, k, 6]
        diag = np.sqrt(dxa * dxa + dya * dya)         # precomputed host-side
        base = BOX_OFF + k * CODE_SIZE
        scale[:, base + 0] = diag; offset[:, base + 0] = xa
        scale[:, base + 1] = diag; offset[:, base + 1] = ya
        scale[:, base + 2] = dza;  offset[:, base + 2] = za
        scale[:, base + 3] = dxa;  is_exp[base + 3] = 1.0
        scale[:, base + 4] = dya;  is_exp[base + 4] = 1.0
        scale[:, base + 5] = dza;  is_exp[base + 5] = 1.0
        offset[:, base + 6] = ra;  is_rot[base + 6] = 1.0
    meta = np.zeros((8, MAIN_W), np.float32)          # full (8,128) tile
    meta[0] = is_exp
    meta[1] = is_rot
    return scale.astype(np.float32), offset.astype(np.float32), meta


# ----------------------- parameters & weight packing ---------------------------
def init_params(key):
    c = INPUT_CHANNELS
    ks = jax.random.split(key, 6)
    # Matmul form (C_in, C_out): equivalent to PyTorch 1x1 conv weight transposed.
    w = lambda k, cout: (0.05 * jax.random.normal(k, (c, cout))).astype(jnp.float32)
    bb = lambda k, cout: (0.05 * jax.random.normal(k, (cout,))).astype(jnp.float32)
    return dict(w_cls=w(ks[0], N_CLS), b_cls=bb(ks[1], N_CLS),
                w_box=w(ks[2], N_BOX), b_box=bb(ks[3], N_BOX),
                w_dir=w(ks[4], N_DIR), b_dir=bb(ks[5], N_DIR))


def pack_head(params):
    """Pack cls/box/dir 1x1-conv weights into one lane-padded (C, 256) matmul weight
    + (1, 256) bias. Lanes 128+18+7k+6 hold the differenced dir weights (bin1-bin0),
    whose sign equals torch.max(dir_logits, -1)[1] for 2 bins."""
    c = params["w_cls"].shape[0]
    w = jnp.zeros((c, FULL_W), jnp.float32)
    b = jnp.zeros((FULL_W,), jnp.float32)
    w = w.at[:, CLS_OFF:CLS_OFF + N_CLS].set(params["w_cls"])
    b = b.at[CLS_OFF:CLS_OFF + N_CLS].set(params["b_cls"])
    w = w.at[:, BOX_OFF:BOX_OFF + N_BOX].set(params["w_box"])
    b = b.at[BOX_OFF:BOX_OFF + N_BOX].set(params["b_box"])
    w = w.at[:, DIR_OFF:DIR_OFF + N_DIR].set(params["w_dir"])
    b = b.at[DIR_OFF:DIR_OFF + N_DIR].set(params["b_dir"])
    w_dir = params["w_dir"].reshape(c, NUM_ANCHORS_PER_LOC, NUM_DIR_BINS)
    b_dir = params["b_dir"].reshape(NUM_ANCHORS_PER_LOC, NUM_DIR_BINS)
    shift_lanes = MAIN_W + ROT_LANES
    w = w.at[:, shift_lanes].set(w_dir[:, :, 1] - w_dir[:, :, 0])
    b = b.at[shift_lanes].set(b_dir[:, 1] - b_dir[:, 0])
    return w, b[None, :]


def prepare_buffers(params):
    scale_np, offset_np, meta_np = build_decode_tables(ANCHORS_FLAT)
    w_full, b_full = pack_head(params)
    return dict(w_full=w_full, b_full=b_full,
                scale=jnp.asarray(scale_np),       # (HW, 128)
                offset=jnp.asarray(offset_np),     # (HW, 128)
                meta=jnp.asarray(meta_np))         # (8, 128)


# ----------------------- fused Pallas kernel: heads + box decode ----------------
def anchor_head_kernel(x_ref, w_ref, b_ref, scale_ref, offset_ref, meta_ref,
                       raw_ref, dec_ref, *, dir_offset, dir_limit_offset,
                       period, inv_period):
    # Fused 1x1-conv heads: one MXU matmul, 256 lane-dense output columns.
    y_full = (jnp.dot(x_ref[...], w_ref[...], preferred_element_type=jnp.float32)
              + b_ref[...])
    raw_ref[...] = y_full

    y = y_full[:, :MAIN_W]          # cls | box residuals | dir logits | pad
    dir_diff = y_full[:, MAIN_W:]   # (bin1 - bin0), lane-aligned with rotation lanes

    scale = scale_ref[...]
    offset = offset_ref[...]
    is_exp = jnp.broadcast_to(meta_ref[0:1, :], y.shape) > 0.5
    is_rot = jnp.broadcast_to(meta_ref[1:2, :], y.shape) > 0.5

    # ResidualCoder.decode_torch (pass-through lanes have scale=1, offset=0).
    dec_lin = y * scale + offset                    # x, y, z, rot (+ pass-through)
    dec_exp = jnp.exp(y) * scale                    # dx, dy, dz
    dec = jnp.where(is_exp, dec_exp, dec_lin)

    # Direction-bin correction on rotation lanes:
    #   rg = limit_period(rt + ra - dir_offset) + dir_offset + period * label
    val = dec - dir_offset
    rot = val - jnp.floor(val * inv_period + dir_limit_offset) * period
    label = jnp.where(dir_diff > 0.0, 1.0, 0.0)     # == argmax over 2 dir bins
    rot = rot + dir_offset + period * label
    dec_ref[...] = jnp.where(is_rot, rot, dec)


def fused_anchor_head(x_rows, w_full, b_full, scale_rows, offset_rows, meta, *, tn=None):
    n, c = x_rows.shape
    tn = n if tn is None else tn                    # single grid step at this size
    assert n % tn == 0
    kern = functools.partial(anchor_head_kernel,
                             dir_offset=DIR_OFFSET, dir_limit_offset=DIR_LIMIT_OFFSET,
                             period=PERIOD, inv_period=INV_PERIOD)
    return pl.pallas_call(
        kern,
        out_shape=(jax.ShapeDtypeStruct((n, FULL_W), jnp.float32),   # raw head outputs
                   jax.ShapeDtypeStruct((n, MAIN_W), jnp.float32)),  # decoded
        grid_spec=pltpu.PrefetchScalarGridSpec(
            num_scalar_prefetch=0,
            grid=(n // tn,),
            in_specs=[
                pl.BlockSpec((tn, c), lambda i: (i, 0)),
                pl.BlockSpec((c, FULL_W), lambda i: (0, 0)),
                pl.BlockSpec((1, FULL_W), lambda i: (0, 0)),
                pl.BlockSpec((tn, MAIN_W), lambda i: (i, 0)),
                pl.BlockSpec((tn, MAIN_W), lambda i: (i, 0)),
                pl.BlockSpec((8, MAIN_W), lambda i: (0, 0)),
            ],
            out_specs=(pl.BlockSpec((tn, FULL_W), lambda i: (i, 0)),
                       pl.BlockSpec((tn, MAIN_W), lambda i: (i, 0))),
        ),
        compiler_params=pltpu.CompilerParams(dimension_semantics=("parallel",)),
    )(x_rows, w_full, b_full, scale_rows, offset_rows, meta)


# ----------------------- forward glue ------------------------------------------
def anchor_head_forward(buffers, x):
    """x: NCHW (B, C, H, W) f32. Returns (batch_cls_preds, batch_box_preds, y_raw)."""
    b, c, hf, wf = x.shape
    n = b * hf * wf
    x_rows = jnp.transpose(x, (0, 2, 3, 1)).reshape(n, c)
    scale_rows = jnp.tile(buffers["scale"], (b, 1))     # anchors identical per batch
    offset_rows = jnp.tile(buffers["offset"], (b, 1))
    y_raw, y_dec = fused_anchor_head(x_rows, buffers["w_full"], buffers["b_full"],
                                     scale_rows, offset_rows, buffers["meta"])
    a = hf * wf * NUM_ANCHORS_PER_LOC
    batch_cls_preds = y_raw[:, CLS_OFF:CLS_OFF + N_CLS].reshape(b, a, NUM_CLASS)   # (B, A, 3)
    batch_box_preds = y_dec[:, BOX_OFF:BOX_OFF + N_BOX].reshape(b, a, CODE_SIZE)   # (B, A, 7)
    return batch_cls_preds, batch_box_preds, y_raw


# ----------------------- pure-JAX reference decode (for verification) -----------
def reference_decode_from_raw(y_raw, anchors_flat, b):
    a = NUM_ANCHORS
    cls_ref = y_raw[:, CLS_OFF:CLS_OFF + N_CLS].reshape(b, a, NUM_CLASS)
    box = y_raw[:, BOX_OFF:BOX_OFF + N_BOX].reshape(b, a, CODE_SIZE)
    anc = jnp.broadcast_to(anchors_flat[None], (b, a, CODE_SIZE))
    xa, ya, za, dxa, dya, dza, ra = [anc[..., i] for i in range(7)]
    xt, yt, zt, dxt, dyt, dzt, rt = [box[..., i] for i in range(7)]
    diag = jnp.sqrt(dxa * dxa + dya * dya)
    xg = xt * diag + xa
    yg = yt * diag + ya
    zg = zt * dza + za
    dxg = jnp.exp(dxt) * dxa
    dyg = jnp.exp(dyt) * dya
    dzg = jnp.exp(dzt) * dza
    rg = rt + ra
    # torch.max over 2 dir bins == (bin1 > bin0); kernel uses the fused diff column.
    diff = y_raw[:, MAIN_W + ROT_LANES].reshape(b, a)
    labels = jnp.where(diff > 0.0, 1.0, 0.0)
    val = rg - DIR_OFFSET
    dir_rot = val - jnp.floor(val * INV_PERIOD + DIR_LIMIT_OFFSET) * PERIOD
    rg = dir_rot + DIR_OFFSET + PERIOD * labels
    box_ref = jnp.stack([xg, yg, zg, dxg, dyg, dzg, rg], axis=-1)
    return cls_ref, box_ref


# ----------------------- main ----------------------------------------------------
if __name__ == "__main__":
    key = jax.random.PRNGKey(0)
    kx, kp = jax.random.split(key)
    params = init_params(kp)
    buffers = prepare_buffers(params)
    anchors_flat = jnp.asarray(ANCHORS_FLAT)
    x = jax.random.normal(kx, (BATCH, INPUT_CHANNELS, FMAP_H, FMAP_W), dtype=jnp.float32)

    fwd = jax.jit(functools.partial(anchor_head_forward, buffers))
    batch_cls_preds, batch_box_preds, y_raw = jax.block_until_ready(fwd(x))

    # data_dict bookkeeping (as in the PyTorch module)
    data_dict = {
        "batch_size": BATCH,
        "spatial_features_2d": x,
        "batch_cls_preds": batch_cls_preds,   # (B, A, num_class)
        "batch_box_preds": batch_box_preds,   # (B, A, 7)
        "cls_preds_normalized": False,
    }

    # ---- verification ----
    # (1) fused head matmul vs XLA reference (tolerance covers a possible bf16
    #     input-truncation MXU path at default matmul precision).
    x_rows = jnp.transpose(x, (0, 2, 3, 1)).reshape(-1, INPUT_CHANNELS)
    y_ref = (jnp.dot(x_rows, buffers["w_full"], precision=lax.Precision.HIGHEST)
             + buffers["b_full"])
    np.testing.assert_allclose(np.asarray(y_raw), np.asarray(y_ref), rtol=0.0, atol=5e-3)

    # (2) in-kernel decode vs pure-JAX decode fed the SAME head outputs (tight).
    cls_ref, box_ref = reference_decode_from_raw(y_raw, anchors_flat, BATCH)
    np.testing.assert_allclose(np.asarray(batch_cls_preds), np.asarray(cls_ref),
                               rtol=0.0, atol=1e-6)
    np.testing.assert_allclose(np.asarray(batch_box_preds), np.asarray(box_ref),
                               rtol=1e-4, atol=1e-4)

    # (3) fused (bin1 - bin0) direction label matches torch-style argmax of the raw
    #     dir logits wherever the two bins are not numerically tied.
    y_raw_np = np.asarray(y_raw)
    d = y_raw_np[:, DIR_OFF:DIR_OFF + N_DIR].reshape(-1, NUM_ANCHORS_PER_LOC, NUM_DIR_BINS)
    lbl_argmax = d[..., 1] > d[..., 0]
    lbl_kernel = y_raw_np[:, MAIN_W + ROT_LANES] > 0.0
    margin = np.abs(d[..., 1] - d[..., 0])
    assert np.all((lbl_argmax == lbl_kernel) | (margin < 1e-4))

    assert batch_cls_preds.shape == (BATCH, NUM_ANCHORS, NUM_CLASS)
    assert batch_box_preds.shape == (BATCH, NUM_ANCHORS, CODE_SIZE)
    print("KERNEL_OK")
</pallas_src>

<mosaic_0001>
module attributes {stable_mosaic.version = 11 : i64} {
  func.func @anchor_head_kernel(%arg0: i32, %arg1: memref<512x32xf32, #tpu.memory_space<vmem>>, %arg2: memref<32x256xf32, #tpu.memory_space<vmem>>, %arg3: memref<1x256xf32, #tpu.memory_space<vmem>>, %arg4: memref<512x128xf32, #tpu.memory_space<vmem>>, %arg5: memref<512x128xf32, #tpu.memory_space<vmem>>, %arg6: memref<8x128xf32, #tpu.memory_space<vmem>>, %arg7: memref<512x256xf32, #tpu.memory_space<vmem>>, %arg8: memref<512x128xf32, #tpu.memory_space<vmem>>) attributes {dimension_semantics = [#tpu.dimension_semantics<parallel>], iteration_bounds = array<i64: 1>, scalar_prefetch = 0 : i64, scratch_operands = 0 : i64, tpu.core_type = #tpu.core_type<tc>, window_params = [{transform_indices = @transform_0, window_bounds = array<i64: 512, 32>}, {pipeline_mode = #tpu.pipeline_mode<synchronous>, transform_indices = @transform_1, window_bounds = array<i64: 32, 256>}, {pipeline_mode = #tpu.pipeline_mode<synchronous>, transform_indices = @transform_2, window_bounds = array<i64: 1, 256>}, {transform_indices = @transform_3, window_bounds = array<i64: 512, 128>}, {transform_indices = @transform_4, window_bounds = array<i64: 512, 128>}, {pipeline_mode = #tpu.pipeline_mode<synchronous>, transform_indices = @transform_5, window_bounds = array<i64: 8, 128>}, {transform_indices = @transform_6, window_bounds = array<i64: 512, 256>}, {transform_indices = @transform_7, window_bounds = array<i64: 512, 128>}]} {
    %c0 = arith.constant 0 : index
    %c0_0 = arith.constant 0 : index
    %0 = vector.load %arg1[%c0, %c0_0] : memref<512x32xf32, #tpu.memory_space<vmem>>, vector<512x32xf32>
    %c0_1 = arith.constant 0 : index
    %c0_2 = arith.constant 0 : index
    %1 = vector.load %arg2[%c0_1, %c0_2] : memref<32x256xf32, #tpu.memory_space<vmem>>, vector<32x256xf32>
    %cst = arith.constant dense<0.000000e+00> : vector<512x256xf32>
    %2 = tpu.matmul %0, %1, %cst {dimension_numbers = #tpu.dot_dimension_numbers<[1], [0], [0], [1], [0, 0, 1, 1], [], []>} : vector<512x32xf32>, vector<32x256xf32>, vector<512x256xf32> -> vector<512x256xf32>
    %c0_3 = arith.constant 0 : index
    %c0_4 = arith.constant 0 : index
    %3 = vector.load %arg3[%c0_3, %c0_4] : memref<1x256xf32, #tpu.memory_space<vmem>>, vector<1x256xf32>
    %4 = vector.broadcast %3 : vector<1x256xf32> to vector<512x256xf32>
    %5 = arith.addf %2, %4 : vector<512x256xf32>
    %c0_5 = arith.constant 0 : index
    %c0_6 = arith.constant 0 : index
    %6 = vector.load %arg7[%c0_5, %c0_6] : memref<512x256xf32, #tpu.memory_space<vmem>>, vector<512x256xf32>
    tpu.vector_store %arg7[%c0_5, %c0_6], %5 {strides = array<i32>} : memref<512x256xf32, #tpu.memory_space<vmem>>, vector<512x256xf32>,
    %7 = vector.extract_strided_slice %5 {offsets = [0, 0], sizes = [512, 128], strides = [1, 1]} : vector<512x256xf32> to vector<512x128xf32>
    %8 = vector.extract_strided_slice %5 {offsets = [0, 128], sizes = [512, 128], strides = [1, 1]} : vector<512x256xf32> to vector<512x128xf32>
    %c0_7 = arith.constant 0 : index
    %c0_8 = arith.constant 0 : index
    %9 = vector.load %arg4[%c0_7, %c0_8] : memref<512x128xf32, #tpu.memory_space<vmem>>, vector<512x128xf32>
    %c0_9 = arith.constant 0 : index
    %c0_10 = arith.constant 0 : index
    %10 = vector.load %arg5[%c0_9, %c0_10] : memref<512x128xf32, #tpu.memory_space<vmem>>, vector<512x128xf32>
    %c0_11 = arith.constant 0 : index
    %c0_12 = arith.constant 0 : index
    %11 = vector.load %arg6[%c0_11, %c0_12] : memref<8x128xf32, #tpu.memory_space<vmem>>, vector<1x128xf32>
    %12 = vector.shape_cast %11 : vector<1x128xf32> to vector<1x128xf32>
    %13 = vector.broadcast %12 : vector<1x128xf32> to vector<512x128xf32>
    %cst_13 = arith.constant 5.000000e-01 : f32
    %14 = vector.broadcast %cst_13 : f32 to vector<512x128xf32>
    %15 = arith.cmpf ogt, %13, %14 : vector<512x128xf32>
    %c1 = arith.constant 1 : index
    %c0_14 = arith.constant 0 : index
    %16 = vector.load %arg6[%c1, %c0_14] : memref<8x128xf32, #tpu.memory_space<vmem>>, vector<1x128xf32>
    %17 = vector.shape_cast %16 : vector<1x128xf32> to vector<1x128xf32>
    %18 = vector.broadcast %17 : vector<1x128xf32> to vector<512x128xf32>
    %cst_15 = arith.constant 5.000000e-01 : f32
    %19 = vector.broadcast %cst_15 : f32 to vector<512x128xf32>
    %20 = arith.cmpf ogt, %18, %19 : vector<512x128xf32>
    %21 = arith.mulf %7, %9 : vector<512x128xf32>
    %22 = arith.addf %21, %10 : vector<512x128xf32>
    %23 = math.exp %7 : vector<512x128xf32>
    %24 = arith.mulf %23, %9 : vector<512x128xf32>
    %25 = arith.select %15, %24, %22 : vector<512x128xi1>, vector<512x128xf32>
    %cst_16 = arith.constant 7.853900e-01 : f32
    %26 = vector.broadcast %cst_16 : f32 to vector<512x128xf32>
    %27 = arith.subf %25, %26 : vector<512x128xf32>
    %cst_17 = arith.constant 0.318309873 : f32
    %28 = vector.broadcast %cst_17 : f32 to vector<512x128xf32>
    %29 = arith.mulf %27, %28 : vector<512x128xf32>
    %cst_18 = arith.constant 0.000000e+00 : f32
    %30 = vector.broadcast %cst_18 : f32 to vector<512x128xf32>
    %31 = arith.addf %29, %30 : vector<512x128xf32>
    %32 = math.floor %31 : vector<512x128xf32>
    %cst_19 = arith.constant 3.14159274 : f32
    %33 = vector.broadcast %cst_19 : f32 to vector<512x128xf32>
    %34 = arith.mulf %32, %33 : vector<512x128xf32>
    %35 = arith.subf %27, %34 : vector<512x128xf32>
    %cst_20 = arith.constant 0.000000e+00 : f32
    %36 = vector.broadcast %cst_20 : f32 to vector<512x128xf32>
    %37 = arith.cmpf ogt, %8, %36 : vector<512x128xf32>
    %cst_21 = arith.constant 1.000000e+00 : f32
    %cst_22 = arith.constant 0.000000e+00 : f32
    %38 = vector.broadcast %cst_21 : f32 to vector<512x128xf32>
    %39 = vector.broadcast %cst_22 : f32 to vector<512x128xf32>
    %40 = arith.select %37, %38, %39 : vector<512x128xi1>, vector<512x128xf32>
    %cst_23 = arith.constant 7.853900e-01 : f32
    %41 = vector.broadcast %cst_23 : f32 to vector<512x128xf32>
    %42 = arith.addf %35, %41 : vector<512x128xf32>
    %cst_24 = arith.constant 3.14159274 : f32
    %43 = vector.broadcast %cst_24 : f32 to vector<512x128xf32>
    %44 = arith.mulf %43, %40 : vector<512x128xf32>
    %45 = arith.addf %42, %44 : vector<512x128xf32>
    %46 = arith.select %20, %45, %25 : vector<512x128xi1>, vector<512x128xf32>
    %c0_25 = arith.constant 0 : index
    %c0_26 = arith.constant 0 : index
    %47 = vector.load %arg8[%c0_25, %c0_26] : memref<512x128xf32, #tpu.memory_space<vmem>>, vector<512x128xf32>
    tpu.vector_store %arg8[%c0_25, %c0_26], %46 {strides = array<i32>} : memref<512x128xf32, #tpu.memory_space<vmem>>, vector<512x128xf32>,
    return
  }
  func.func @transform_0(%arg0: i32) -> (i32, i32) {
    %c0_i32 = arith.constant 0 : i32
    %c0_i32_0 = arith.constant 0 : i32
    return %arg0, %c0_i32 : i32, i32
  }
  func.func @transform_1(%arg0: i32) -> (i32, i32) {
    %c0_i32 = arith.constant 0 : i32
    %c0_i32_0 = arith.constant 0 : i32
    %c0_i32_1 = arith.constant 0 : i32
    return %c0_i32, %c0_i32_0 : i32, i32
  }
  func.func @transform_2(%arg0: i32) -> (i32, i32) {
    %c0_i32 = arith.constant 0 : i32
    %c0_i32_0 = arith.constant 0 : i32
    %c0_i32_1 = arith.constant 0 : i32
    return %c0_i32, %c0_i32_0 : i32, i32
  }
  func.func @transform_3(%arg0: i32) -> (i32, i32) {
    %c0_i32 = arith.constant 0 : i32
    %c0_i32_0 = arith.constant 0 : i32
    return %arg0, %c0_i32 : i32, i32
  }
  func.func @transform_4(%arg0: i32) -> (i32, i32) {
    %c0_i32 = arith.constant 0 : i32
    %c0_i32_0 = arith.constant 0 : i32
    return %arg0, %c0_i32 : i32, i32
  }
  func.func @transform_5(%arg0: i32) -> (i32, i32) {
    %c0_i32 = arith.constant 0 : i32
    %c0_i32_0 = arith.constant 0 : i32
    %c0_i32_1 = arith.constant 0 : i32
    return %c0_i32, %c0_i32_0 : i32, i32
  }
  func.func @transform_6(%arg0: i32) -> (i32, i32) {
    %c0_i32 = arith.constant 0 : i32
    %c0_i32_0 = arith.constant 0 : i32
    return %arg0, %c0_i32 : i32, i32
  }
  func.func @transform_7(%arg0: i32) -> (i32, i32) {
    %c0_i32 = arith.constant 0 : i32
    %c0_i32_0 = arith.constant 0 : i32
    return %arg0, %c0_i32 : i32, i32
  }
}

</mosaic_0001>

<llo_original>
// kernel: anchor_head_forward.1
$region0: #{anchor_head_forward.1}
  #allocation0 [shape = 'u32[]', space=smem, size = 0x4, offset = 0x4, fixed_abs, tag = 'smem constant byte address 0x4 - core index']
  #allocation1 [shape = 'u32[144,128]{1,0:T(1,128)}', space=vmem, size = 0x12000, scoped, tag = 'internal scratch']
  %s0 = inlined_call_operand.hbm [shape: f32[512,32], index: 0, kind: input, shape index: {}]
  %s1 = inlined_call_operand.hbm [shape: f32[32,256], index: 1, kind: input, shape index: {}]
  %s2 = inlined_call_operand.hbm [shape: f32[1,256], index: 2, kind: input, shape index: {}]
  %s3 = inlined_call_operand.vmem [shape: f32[512,128], index: 3, kind: input, shape index: {}]
  %s4 = inlined_call_operand.vmem [shape: f32[512,128], index: 4, kind: input, shape index: {}]
  %s5 = inlined_call_operand.hbm [shape: f32[8,128], index: 5, kind: input, shape index: {}]
  %s6 = inlined_call_operand.vmem [shape: f32[512,256], index: 6, kind: output, shape index: {0}]
  %s7 = inlined_call_operand.vmem [shape: f32[512,128], index: 7, kind: output, shape index: {1}]
  %8 = xla_tuple %s6, %s7
  %s9 = sld [smem:[#allocation0]]
  $region58: #{anchor_head_forward.1} parent=0
    _
  %s11 = ssub.s32 1, %s9
  %s12 = scalar_select 0, %s11, %s9
  $region1: #{anchor_head_forward.1} parent=0
    #allocation2 [shape = 'u8[262144]{0}', space=vmem, size = 0x40000, scoped, tag = 'input window, operand 0, single buffered']
    #allocation3 [shape = 's32[1]{0}', space=sflag, size = 0x4, scoped, tag = 'scoped memory for anchor_head_forward.1']
    #allocation4 [shape = 'u8[32768]{0}', space=vmem, size = 0x8000, scoped, tag = 'input window, operand 1, single buffered']
    #allocation5 [shape = 's32[1]{0}', space=sflag, size = 0x4, scoped, tag = 'scoped memory for anchor_head_forward.1']
    #allocation6 [shape = 'u8[1024]{0}', space=vmem, size = 0x400, scoped, tag = 'input window, operand 2, single buffered']
    #allocation7 [shape = 'u8[4096]{0}', space=vmem, size = 0x1000, scoped, tag = 'input window, operand 5, single buffered']
    #allocation8 [shape = 's32[1]{0}', space=sflag, size = 0x4, scoped, tag = 'scoped memory for anchor_head_forward.1']
    %13 = vsyncpa [#allocation3], 0
    %14 = vsyncpa [#allocation5], 0
    %15 = vsyncpa [#allocation8], 0
    // Predicated region
    $region2: #{anchor_head_forward.1} parent=1 // pred_check
      _
    $region3: #{anchor_head_forward.1} parent=1 // pred_check_branch
      %17 = sbr.rel (0) target = $region5
    $region4: #{anchor_head_forward.1} parent=1 // pred_region
      %s19 = ssub.s32 8192, 8192
      %20 = vsyncadd [#allocation3], %s19
      %s21 = sshll.u32 [#allocation2], 4
      %s22 = int_to_ptr.vmem [resolvable:$true] %s21
      %27 = dma.hbm_to_vmem [thread:$0]  %s0, 8192, %s22, [#allocation3], 128, 128, 8
    $region5: #{anchor_head_forward.1} parent=1 // pred_fallthru
      _
    // Predicated region
    $region6: #{anchor_head_forward.1} parent=1 // pred_check
      _
    $region7: #{anchor_head_forward.1} parent=1 // pred_check_branch
      %29 = sbr.rel (0) target = $region9
    $region8: #{anchor_head_forward.1} parent=1 // pred_region
      %s31 = ssub.s32 1024, 1024
      %32 = vsyncadd [#allocation5], %s31
      %s33 = sshll.u32 [#allocation4], 4
      %s34 = int_to_ptr.vmem [resolvable:$true] %s33
      %39 = dma.hbm_to_vmem [thread:$0]  %s1, 1024, %s34, [#allocation5], 256, 256, 16
    $region9: #{anchor_head_forward.1} parent=1 // pred_fallthru
      _
    // Predicated region
    $region10: #{anchor_head_forward.1} parent=1 // pred_check
      _
    $region11: #{anchor_head_forward.1} parent=1 // pred_check_branch
      %41 = sbr.rel (0) target = $region13
    $region12: #{anchor_head_forward.1} parent=1 // pred_region
      %s43 = ssub.s32 32, 32
      %44 = vsyncadd [#allocation5], %s43
      %s46 = sshll.u32 [#allocation6], 4
      %s47 = int_to_ptr.vmem [resolvable:$true] %s46
      %49 = dma.hbm_to_vmem [thread:$0]  %s2, 32, %s47, [#allocation5]
    $region13: #{anchor_head_forward.1} parent=1 // pred_fallthru
      _
    // Predicated region
    $region14: #{anchor_head_forward.1} parent=1 // pred_check
      _
    $region15: #{anchor_head_forward.1} parent=1 // pred_check_branch
      %51 = sbr.rel (0) target = $region17
    $region16: #{anchor_head_forward.1} parent=1 // pred_region
      _
    $region17: #{anchor_head_forward.1} parent=1 // pred_fallthru
      _
    // Predicated region
    $region18: #{anchor_head_forward.1} parent=1 // pred_check
      _
    $region19: #{anchor_head_forward.1} parent=1 // pred_check_branch
      %53 = sbr.rel (0) target = $region21
    $region20: #{anchor_head_forward.1} parent=1 // pred_region
      _
    $region21: #{anchor_head_forward.1} parent=1 // pred_fallthru
      _
    // Predicated region
    $region22: #{anchor_head_forward.1} parent=1 // pred_check
      _
    $region23: #{anchor_head_forward.1} parent=1 // pred_check_branch
      %55 = sbr.rel (0) target = $region25
    $region24: #{anchor_head_forward.1} parent=1 // pred_region
      %s57 = ssub.s32 128, 128
      %58 = vsyncadd [#allocation8], %s57
      %s60 = sshll.u32 [#allocation7], 4
      %s61 = int_to_ptr.vmem [resolvable:$true] %s60
      %63 = dma.hbm_to_vmem [thread:$0]  %s5, 128, %s61, [#allocation8]
    $region25: #{anchor_head_forward.1} parent=1 // pred_fallthru
      _
    // Predicated region
    $region26: #{anchor_head_forward.1} parent=1 // pred_check
      _
    $region27: #{anchor_head_forward.1} parent=1 // pred_check_branch
      %65 = sbr.rel (0) target = $region29
    $region28: #{anchor_head_forward.1} parent=1 // pred_region
      %66 = dma.done [#allocation3], 8192
    $region29: #{anchor_head_forward.1} parent=1 // pred_fallthru
      _
    // Predicated region
    $region30: #{anchor_head_forward.1} parent=1 // pred_check
      _
    $region31: #{anchor_head_forward.1} parent=1 // pred_check_branch
      %68 = sbr.rel (0) target = $region33
    $region32: #{anchor_head_forward.1} parent=1 // pred_region
      %69 = dma.done [#allocation5], 1024
    $region33: #{anchor_head_forward.1} parent=1 // pred_fallthru
      _
    // Predicated region
    $region34: #{anchor_head_forward.1} parent=1 // pred_check
      _
    $region35: #{anchor_head_forward.1} parent=1 // pred_check_branch
      %71 = sbr.rel (0) target = $region37
    $region36: #{anchor_head_forward.1} parent=1 // pred_region
      %72 = dma.done [#allocation5], 32
    $region37: #{anchor_head_forward.1} parent=1 // pred_fallthru
      _
    // Predicated region
    $region38: #{anchor_head_forward.1} parent=1 // pred_check
      _
    $region39: #{anchor_head_forward.1} parent=1 // pred_check_branch
      %74 = sbr.rel (0) target = $region41
    $region40: #{anchor_head_forward.1} parent=1 // pred_region
      %75 = dma.done [#allocation8], 128
    $region41: #{anchor_head_forward.1} parent=1 // pred_fallthru
      _
    %v76 = vld [vmem:[#allocation2] sm:$0xff]
    %v77 = vld [vmem:[#allocation2 + $0x8] sm:$0xff]
    %v78 = vld [vmem:[#allocation2 + $0x10] sm:$0xff]
    %v79 = vld [vmem:[#allocation2 + $0x18] sm:$0xff]
    %v80 = vld [vmem:[#allocation2 + $0x20] sm:$0xff]
    %v81 = vld [vmem:[#allocation2 + $0x28] sm:$0xff]
    %v82 = vld [vmem:[#allocation2 + $0x30] sm:$0xff]
    %v83 = vld [vmem:[#allocation2 + $0x38] sm:$0xff]
    %v84 = vld [vmem:[#allocation2 + $0x40] sm:$0xff]
    %v85 = vld [vmem:[#allocation2 + $0x48] sm:$0xff]
    %v86 = vld [vmem:[#allocation2 + $0x50] sm:$0xff]
    %v87 = vld [vmem:[#allocation2 + $0x58] sm:$0xff]
    %v88 = vld [vmem:[#allocation2 + $0x60] sm:$0xff]
    %v89 = vld [vmem:[#allocation2 + $0x68] sm:$0xff]
    %v90 = vld [vmem:[#allocation2 + $0x70] sm:$0xff]
    %v91 = vld [vmem:[#allocation2 + $0x78] sm:$0xff]
    %v92 = vld [vmem:[#allocation2 + $0x80] sm:$0xff]
    %v93 = vld [vmem:[#allocation2 + $0x88] sm:$0xff]
    %v94 = vld [vmem:[#allocation2 + $0x90] sm:$0xff]
    %v95 = vld [vmem:[#allocation2 + $0x98] sm:$0xff]
    %v96 = vld [vmem:[#allocation2 + $0xa0] sm:$0xff]
    %v97 = vld [vmem:[#allocation2 + $0xa8] sm:$0xff]
    %v98 = vld [vmem:[#allocation2 + $0xb0] sm:$0xff]
    %v99 = vld [vmem:[#allocation2 + $0xb8] sm:$0xff]
    %v100 = vld [vmem:[#allocation2 + $0xc0] sm:$0xff]
    %v101 = vld [vmem:[#allocation2 + $0xc8] sm:$0xff]
    %v102 = vld [vmem:[#allocation2 + $0xd0] sm:$0xff]
    %v103 = vld [vmem:[#allocation2 + $0xd8] sm:$0xff]
    %v104 = vld [vmem:[#allocation2 + $0xe0] sm:$0xff]
    %v105 = vld [vmem:[#allocation2 + $0xe8] sm:$0xff]
    %v106 = vld [vmem:[#allocation2 + $0xf0] sm:$0xff]
    %v107 = vld [vmem:[#allocation2 + $0xf8] sm:$0xff]
    %v108 = vld [vmem:[#allocation2 + $0x100] sm:$0xff]
    %v109 = vld [vmem:[#allocation2 + $0x108] sm:$0xff]
    %v110 = vld [vmem:[#allocation2 + $0x110] sm:$0xff]
    %v111 = vld [vmem:[#allocation2 + $0x118] sm:$0xff]
    %v112 = vld [vmem:[#allocation2 + $0x120] sm:$0xff]
    %v113 = vld [vmem:[#allocation2 + $0x128] sm:$0xff]
    %v114 = vld [vmem:[#allocation2 + $0x130] sm:$0xff]
    %v115 = vld [vmem:[#allocation2 + $0x138] sm:$0xff]
    %v116 = vld [vmem:[#allocation2 + $0x140] sm:$0xff]
    %v117 = vld [vmem:[#allocation2 + $0x148] sm:$0xff]
    %v118 = vld [vmem:[#allocation2 + $0x150] sm:$0xff]
    %v119 = vld [vmem:[#allocation2 + $0x158] sm:$0xff]
    %v120 = vld [vmem:[#allocation2 + $0x160] sm:$0xff]
    %v121 = vld [vmem:[#allocation2 + $0x168] sm:$0xff]
    %v122 = vld [vmem:[#allocation2 + $0x170] sm:$0xff]
    %v123 = vld [vmem:[#allocation2 + $0x178] sm:$0xff]
    %v124 = vld [vmem:[#allocation2 + $0x180] sm:$0xff]
    %v125 = vld [vmem:[#allocation2 + $0x188] sm:$0xff]
    %v126 = vld [vmem:[#allocation2 + $0x190] sm:$0xff]
    %v127 = vld [vmem:[#allocation2 + $0x198] sm:$0xff]
    %v128 = vld [vmem:[#allocation2 + $0x1a0] sm:$0xff]
    %v129 = vld [vmem:[#allocation2 + $0x1a8] sm:$0xff]
    %v130 = vld [vmem:[#allocation2 + $0x1b0] sm:$0xff]
    %v131 = vld [vmem:[#allocation2 + $0x1b8] sm:$0xff]
    %v132 = vld [vmem:[#allocation2 + $0x1c0] sm:$0xff]
    %v133 = vld [vmem:[#allocation2 + $0x1c8] sm:$0xff]
    %v134 = vld [vmem:[#allocation2 + $0x1d0] sm:$0xff]
    %v135 = vld [vmem:[#allocation2 + $0x1d8] sm:$0xff]
    %v136 = vld [vmem:[#allocation2 + $0x1e0] sm:$0xff]
    %v137 = vld [vmem:[#allocation2 + $0x1e8] sm:$0xff]
    %v138 = vld [vmem:[#allocation2 + $0x1f0] sm:$0xff]
    %v139 = vld [vmem:[#allocation2 + $0x1f8] sm:$0xff]
    %v140 = vld [vmem:[#allocation4] sm:$0xff]
    %v141 = vld [vmem:[#allocation4 + $0x8] sm:$0xff]
    %v142 = vld [vmem:[#allocation4 + $0x10] sm:$0xff]
    %v143 = vld [vmem:[#allocation4 + $0x18] sm:$0xff]
    %v144 = vld [vmem:[#allocation4 + $0x20] sm:$0xff]
    %v145 = vld [vmem:[#allocation4 + $0x28] sm:$0xff]
    %v146 = vld [vmem:[#allocation4 + $0x30] sm:$0xff]
    %v147 = vld [vmem:[#allocation4 + $0x38] sm:$0xff]
    %v148 = vld [vmem:[#allocation6] sm:$0x3]
    %v150 = vlaneseq
    %v151 = vshrl.u32 %v150, 7
    %v152 = vsub.s32 0, %v151
    %v153 = vrot.slane %v148, %v152
    %v154 = vlaneseq
    %v155 = vshrl.u32 %v154, 7
    %v156 = vsub.s32 1, %v155
    %v157 = vrot.slane %v148, %v156
    %vm160 = vcmask 261120
    %v162 = vsel %vm160, %v76, 0
    %v165 = vsel %vm160, %v77, 0
    %v168 = vsel %vm160, %v78, 0
    %v171 = vsel %vm160, %v79, 0
    %v174 = vsel %vm160, %v80, 0
    %v177 = vsel %vm160, %v81, 0
    %v180 = vsel %vm160, %v82, 0
    %v183 = vsel %vm160, %v83, 0
    %v186 = vsel %vm160, %v84, 0
    %v189 = vsel %vm160, %v85, 0
    %v192 = vsel %vm160, %v86, 0
    %v195 = vsel %vm160, %v87, 0
    %v198 = vsel %vm160, %v88, 0
    %v201 = vsel %vm160, %v89, 0
    %v204 = vsel %vm160, %v90, 0
    %v207 = vsel %vm160, %v91, 0
    %v210 = vsel %vm160, %v92, 0
    %v213 = vsel %vm160, %v93, 0
    %v216 = vsel %vm160, %v94, 0
    %v219 = vsel %vm160, %v95, 0
    %v222 = vsel %vm160, %v96, 0
    %v225 = vsel %vm160, %v97, 0
    %v228 = vsel %vm160, %v98, 0
    %v231 = vsel %vm160, %v99, 0
    %v234 = vsel %vm160, %v100, 0
    %v237 = vsel %vm160, %v101, 0
    %v240 = vsel %vm160, %v102, 0
    %v243 = vsel %vm160, %v103, 0
    %v246 = vsel %vm160, %v104, 0
    %v249 = vsel %vm160, %v105, 0
    %v252 = vsel %vm160, %v106, 0
    %v255 = vsel %vm160, %v107, 0
    %v258 = vsel %vm160, %v108, 0
    %v261 = vsel %vm160, %v109, 0
    %v264 = vsel %vm160, %v110, 0
    %v267 = vsel %vm160, %v111, 0
    %v270 = vsel %vm160, %v112, 0
    %v273 = vsel %vm160, %v113, 0
    %v276 = vsel %vm160, %v114, 0
    %v279 = vsel %vm160, %v115, 0
    %v282 = vsel %vm160, %v116, 0
    %v285 = vsel %vm160, %v117, 0
    %v288 = vsel %vm160, %v118, 0
    %v291 = vsel %vm160, %v119, 0
    %v294 = vsel %vm160, %v120, 0
    %v297 = vsel %vm160, %v121, 0
    %v300 = vsel %vm160, %v122, 0
    %v303 = vsel %vm160, %v123, 0
    %v306 = vsel %vm160, %v124, 0
    %v309 = vsel %vm160, %v125, 0
    %v312 = vsel %vm160, %v126, 0
    %v315 = vsel %vm160, %v127, 0
    %v318 = vsel %vm160, %v128, 0
    %v321 = vsel %vm160, %v129, 0
    %v324 = vsel %vm160, %v130, 0
    %v327 = vsel %vm160, %v131, 0
    %v330 = vsel %vm160, %v132, 0
    %v333 = vsel %vm160, %v133, 0
    %v336 = vsel %vm160, %v134, 0
    %v339 = vsel %vm160, %v135, 0
    %v342 = vsel %vm160, %v136, 0
    %v345 = vsel %vm160, %v137, 0
    %v348 = vsel %vm160, %v138, 0
    %v351 = vsel %vm160, %v139, 0
    %353 = vmatprep.subr.mxu0 %v141
    %354 = vmatpush1.msra.mxu0 %v140
    %355 = vmatprep.subr.mxu0 %v143
    %356 = vmatpush1.msra.mxu0 %v142
    %357 = vmatprep.subr.mxu0 %v145
    %358 = vmatpush1.msra.mxu0 %v144
    %359 = vmatprep.subr.mxu0 %v147
    %360 = vmatpush1.msra.mxu0 %v146
    %361 = vmatprep.subr.mxu0 0.0
    %362 = vmatpush1.msra.mxu0 0.0
    %363 = vmatprep.subr.mxu0 0.0
    %364 = vmatpush1.msra.mxu0 0.0
    %365 = vmatprep.subr.mxu0 0.0
    %366 = vmatpush1.msra.mxu0 0.0
    %367 = vmatprep.subr.mxu0 0.0
    %368 = vmatpush1.msra.mxu0 0.0
    %369 = vmatprep.subr.mxu0 0.0
    %370 = vmatpush1.msra.mxu0 0.0
    %371 = vmatprep.subr.mxu0 0.0
    %372 = vmatpush1.msra.mxu0 0.0
    %373 = vmatprep.subr.mxu0 0.0
    %374 = vmatpush1.msra.mxu0 0.0
    %375 = vmatprep.subr.mxu0 0.0
    %376 = vmatpush1.msra.mxu0 0.0
    %377 = vmatprep.subr.mxu0 0.0
    %378 = vmatpush1.msra.mxu0 0.0
    %379 = vmatprep.subr.mxu0 0.0
    %380 = vmatpush1.msra.mxu0 0.0
    %381 = vmatprep.subr.mxu0 0.0
    %382 = vmatpush1.msra.mxu0 0.0
    %383 = vmatprep.subr.mxu0 0.0
    %384 = vmatpush1.msra.mxu0 0.0
    %385 = vmatprep.subr.mxu0 0.0
    %386 = vmatpush1.msra.mxu0 0.0
    %387 = vmatprep.subr.mxu0 0.0
    %388 = vmatpush1.msra.mxu0 0.0
    %389 = vmatprep.subr.mxu0 0.0
    %390 = vmatpush1.msra.mxu0 0.0
    %391 = vmatprep.subr.mxu0 0.0
    %392 = vmatpush1.msra.mxu0 0.0
    %393 = vmatprep.subr.mxu0 0.0
    %394 = vmatpush1.msra.mxu0 0.0
    %395 = vmatprep.subr.mxu0 0.0
    %396 = vmatpush1.msra.mxu0 0.0
    %397 = vmatprep.subr.mxu0 0.0
    %398 = vmatpush1.msra.mxu0 0.0
    %399 = vmatprep.subr.mxu0 0.0
    %400 = vmatpush1.msra.mxu0 0.0
    %401 = vmatprep.subr.mxu0 0.0
    %402 = vmatpush1.msra.mxu0 0.0
    %403 = vmatprep.subr.mxu0 0.0
    %404 = vmatpush1.msra.mxu0 0.0
    %405 = vmatprep.subr.mxu0 0.0
    %406 = vmatpush1.msra.mxu0 0.0
    %407 = vmatprep.subr.mxu0 0.0
    %408 = vmatpush1.msra.mxu0 0.0
    %409 = vmatprep.subr.mxu0 0.0
    %410 = vmatpush1.msra.mxu0 0.0
    %411 = vmatprep.subr.mxu0 0.0
    %412 = vmatpush1.msra.mxu0 0.0
    %413 = vmatprep.subr.mxu0 0.0
    %414 = vmatpush1.msra.mxu0 0.0
    %415 = vmatprep.subr.mxu0 0.0
    %416 = vmatpush1.msra.mxu0 0.0
    %417 = vmatprep.mubr.f32.mxu0 0.0
    %418 = vmatmul.mubr.f32.gmra.mrb[0].mxu0 %v162
    %v419 = vpop.f32.mrb[0].mxu0
    %v420 = vadd.f32 %v153, %v419
    %v421 = vpop.f32.mrb[0].mxu0
    %v422 = vadd.f32 %v157, %v421
    %423 = vmatprep.mubr.f32.mxu0 0.0
    %424 = vmatmul.mubr.f32.gmra.mrb[0].mxu0 %v165
    %v425 = vpop.f32.mrb[0].mxu0
    %v426 = vadd.f32 %v153, %v425
    %v427 = vpop.f32.mrb[0].mxu0
    %v428 = vadd.f32 %v157, %v427
    %429 = vmatprep.mubr.f32.mxu0 0.0
    %430 = vmatmul.mubr.f32.gmra.mrb[0].mxu0 %v168
    %v431 = vpop.f32.mrb[0].mxu0
    %v432 = vadd.f32 %v153, %v431
    %v433 = vpop.f32.mrb[0].mxu0
    %v434 = vadd.f32 %v157, %v433
    %435 = vmatprep.mubr.f32.mxu0 0.0
    %436 = vmatmul.mubr.f32.gmra.mrb[0].mxu0 %v171
    %v437 = vpop.f32.mrb[0].mxu0
    %v438 = vadd.f32 %v153, %v437
    %v439 = vpop.f32.mrb[0].mxu0
    %v440 = vadd.f32 %v157, %v439
    %441 = vmatprep.mubr.f32.mxu0 0.0
    %442 = vmatmul.mubr.f32.gmra.mrb[0].mxu0 %v174
    %v443 = vpop.f32.mrb[0].mxu0
    %v444 = vadd.f32 %v153, %v443
    %v445 = vpop.f32.mrb[0].mxu0
    %v446 = vadd.f32 %v157, %v445
    %447 = vmatprep.mubr.f32.mxu0 0.0
    %448 = vmatmul.mubr.f32.gmra.mrb[0].mxu0 %v177
    %v449 = vpop.f32.mrb[0].mxu0
    %v450 = vadd.f32 %v153, %v449
    %v451 = vpop.f32.mrb[0].mxu0
    %v452 = vadd.f32 %v157, %v451
    %453 = vmatprep.mubr.f32.mxu0 0.0
    %454 = vmatmul.mubr.f32.gmra.mrb[0].mxu0 %v180
    %v455 = vpop.f32.mrb[0].mxu0
    %v456 = vadd.f32 %v153, %v455
    %v457 = vpop.f32.mrb[0].mxu0
    %v458 = vadd.f32 %v157, %v457
    %459 = vmatprep.mubr.f32.mxu0 0.0
    %460 = vmatmul.mubr.f32.gmra.mrb[0].mxu0 %v183
    %v461 = vpop.f32.mrb[0].mxu0
    %v462 = vadd.f32 %v153, %v461
    %v463 = vpop.f32.mrb[0].mxu0
    %v464 = vadd.f32 %v157, %v463
    %465 = vmatprep.mubr.f32.mxu0 0.0
    %466 = vmatmul.mubr.f32.gmra.mrb[0].mxu0 %v186
    %v467 = vpop.f32.mrb[0].mxu0
    %v468 = vadd.f32 %v153, %v467
    %v469 = vpop.f32.mrb[0].mxu0
    %v470 = vadd.f32 %v157, %v469
    %471 = vmatprep.mubr.f32.mxu0 0.0
    %472 = vmatmul.mubr.f32.gmra.mrb[0].mxu0 %v189
    %v473 = vpop.f32.mrb[0].mxu0
    %v474 = vadd.f32 %v153, %v473
    %v475 = vpop.f32.mrb[0].mxu0
    %v476 = vadd.f32 %v157, %v475
    %477 = vmatprep.mubr.f32.mxu0 0.0
    %478 = vmatmul.mubr.f32.gmra.mrb[0].mxu0 %v192
    %v479 = vpop.f32.mrb[0].mxu0
    %v480 = vadd.f32 %v153, %v479
    %v481 = vpop.f32.mrb[0].mxu0
    %v482 = vadd.f32 %v157, %v481
    %483 = vmatprep.mubr.f32.mxu0 0.0
    %484 = vmatmul.mubr.f32.gmra.mrb[0].mxu0 %v195
    %v485 = vpop.f32.mrb[0].mxu0
    %v486 = vadd.f32 %v153, %v485
    %v487 = vpop.f32.mrb[0].mxu0
    %v488 = vadd.f32 %v157, %v487
    %489 = vmatprep.mubr.f32.mxu0 0.0
    %490 = vmatmul.mubr.f32.gmra.mrb[0].mxu0 %v198
    %v491 = vpop.f32.mrb[0].mxu0
    %v492 = vadd.f32 %v153, %v491
    %v493 = vpop.f32.mrb[0].mxu0
    %v494 = vadd.f32 %v157, %v493
    %495 = vmatprep.mubr.f32.mxu0 0.0
    %496 = vmatmul.mubr.f32.gmra.mrb[0].mxu0 %v201
    %v497 = vpop.f32.mrb[0].mxu0
    %v498 = vadd.f32 %v153, %v497
    %v499 = vpop.f32.mrb[0].mxu0
    %v500 = vadd.f32 %v157, %v499
    %501 = vmatprep.mubr.f32.mxu0 0.0
    %502 = vmatmul.mubr.f32.gmra.mrb[0].mxu0 %v204
    %v503 = vpop.f32.mrb[0].mxu0
    %v504 = vadd.f32 %v153, %v503
    %v505 = vpop.f32.mrb[0].mxu0
    %v506 = vadd.f32 %v157, %v505
    %507 = vmatprep.mubr.f32.mxu0 0.0
    %508 = vmatmul.mubr.f32.gmra.mrb[0].mxu0 %v207
    %v509 = vpop.f32.mrb[0].mxu0
    %v510 = vadd.f32 %v153, %v509
    %v511 = vpop.f32.mrb[0].mxu0
    %v512 = vadd.f32 %v157, %v511
    %513 = vmatprep.mubr.f32.mxu0 0.0
    %514 = vmatmul.mubr.f32.gmra.mrb[0].mxu0 %v210
    %v515 = vpop.f32.mrb[0].mxu0
    %v516 = vadd.f32 %v153, %v515
    %v517 = vpop.f32.mrb[0].mxu0
    %v518 = vadd.f32 %v157, %v517
    %519 = vmatprep.mubr.f32.mxu0 0.0
    %520 = vmatmul.mubr.f32.gmra.mrb[0].mxu0 %v213
    %v521 = vpop.f32.mrb[0].mxu0
    %v522 = vadd.f32 %v153, %v521
    %v523 = vpop.f32.mrb[0].mxu0
    %v524 = vadd.f32 %v157, %v523
    %525 = vmatprep.mubr.f32.mxu0 0.0
    %526 = vmatmul.mubr.f32.gmra.mrb[0].mxu0 %v216
    %v527 = vpop.f32.mrb[0].mxu0
    %v528 = vadd.f32 %v153, %v527
    %v529 = vpop.f32.mrb[0].mxu0
    %v530 = vadd.f32 %v157, %v529
    %531 = vmatprep.mubr.f32.mxu0 0.0
    %532 = vmatmul.mubr.f32.gmra.mrb[0].mxu0 %v219
    %v533 = vpop.f32.mrb[0].mxu0
    %v534 = vadd.f32 %v153, %v533
    %v535 = vpop.f32.mrb[0].mxu0
    %v536 = vadd.f32 %v157, %v535
    %537 = vmatprep.mubr.f32.mxu0 0.0
    %538 = vmatmul.mubr.f32.gmra.mrb[0].mxu0 %v222
    %v539 = vpop.f32.mrb[0].mxu0
    %v540 = vadd.f32 %v153, %v539
    %v541 = vpop.f32.mrb[0].mxu0
    %v542 = vadd.f32 %v157, %v541
    %543 = vmatprep.mubr.f32.mxu0 0.0
    %544 = vmatmul.mubr.f32.gmra.mrb[0].mxu0 %v225
    %v545 = vpop.f32.mrb[0].mxu0
    %v546 = vadd.f32 %v153, %v545
    %v547 = vpop.f32.mrb[0].mxu0
    %v548 = vadd.f32 %v157, %v547
    %549 = vmatprep.mubr.f32.mxu0 0.0
    %550 = vmatmul.mubr.f32.gmra.mrb[0].mxu0 %v228
    %v551 = vpop.f32.mrb[0].mxu0
    %v552 = vadd.f32 %v153, %v551
    %v553 = vpop.f32.mrb[0].mxu0
    %v554 = vadd.f32 %v157, %v553
    %555 = vmatprep.mubr.f32.mxu0 0.0
    %556 = vmatmul.mubr.f32.gmra.mrb[0].mxu0 %v231
    %v557 = vpop.f32.mrb[0].mxu0
    %v558 = vadd.f32 %v153, %v557
    %v559 = vpop.f32.mrb[0].mxu0
    %v560 = vadd.f32 %v157, %v559
    %561 = vmatprep.mubr.f32.mxu0 0.0
    %562 = vmatmul.mubr.f32.gmra.mrb[0].mxu0 %v234
    %v563 = vpop.f32.mrb[0].mxu0
    %v564 = vadd.f32 %v153, %v563
    %v565 = vpop.f32.mrb[0].mxu0
    %v566 = vadd.f32 %v157, %v565
    %567 = vmatprep.mubr.f32.mxu0 0.0
    %568 = vmatmul.mubr.f32.gmra.mrb[0].mxu0 %v237
    %v569 = vpop.f32.mrb[0].mxu0
    %v570 = vadd.f32 %v153, %v569
    %v571 = vpop.f32.mrb[0].mxu0
    %v572 = vadd.f32 %v157, %v571
    %573 = vmatprep.mubr.f32.mxu0 0.0
    %574 = vmatmul.mubr.f32.gmra.mrb[0].mxu0 %v240
    %v575 = vpop.f32.mrb[0].mxu0
    %v576 = vadd.f32 %v153, %v575
    %v577 = vpop.f32.mrb[0].mxu0
    %v578 = vadd.f32 %v157, %v577
    %579 = vmatprep.mubr.f32.mxu0 0.0
    %580 = vmatmul.mubr.f32.gmra.mrb[0].mxu0 %v243
    %v581 = vpop.f32.mrb[0].mxu0
    %v582 = vadd.f32 %v153, %v581
    %v583 = vpop.f32.mrb[0].mxu0
    %v584 = vadd.f32 %v157, %v583
    %585 = vmatprep.mubr.f32.mxu0 0.0
    %586 = vmatmul.mubr.f32.gmra.mrb[0].mxu0 %v246
    %v587 = vpop.f32.mrb[0].mxu0
    %v588 = vadd.f32 %v153, %v587
    %v589 = vpop.f32.mrb[0].mxu0
    %v590 = vadd.f32 %v157, %v589
    %591 = vmatprep.mubr.f32.mxu0 0.0
    %592 = vmatmul.mubr.f32.gmra.mrb[0].mxu0 %v249
    %v593 = vpop.f32.mrb[0].mxu0
    %v594 = vadd.f32 %v153, %v593
    %v595 = vpop.f32.mrb[0].mxu0
    %v596 = vadd.f32 %v157, %v595
    %597 = vmatprep.mubr.f32.mxu0 0.0
    %598 = vmatmul.mubr.f32.gmra.mrb[0].mxu0 %v252
    %v599 = vpop.f32.mrb[0].mxu0
    %v600 = vadd.f32 %v153, %v599
    %v601 = vpop.f32.mrb[0].mxu0
    %v602 = vadd.f32 %v157, %v601
    %603 = vmatprep.mubr.f32.mxu0 0.0
    %604 = vmatmul.mubr.f32.gmra.mrb[0].mxu0 %v255
    %v605 = vpop.f32.mrb[0].mxu0
    %v606 = vadd.f32 %v153, %v605
    %v607 = vpop.f32.mrb[0].mxu0
    %v608 = vadd.f32 %v157, %v607
    %609 = vmatprep.mubr.f32.mxu0 0.0
    %610 = vmatmul.mubr.f32.gmra.mrb[0].mxu0 %v258
    %v611 = vpop.f32.mrb[0].mxu0
    %v612 = vadd.f32 %v153, %v611
    %v613 = vpop.f32.mrb[0].mxu0
    %v614 = vadd.f32 %v157, %v613
    %615 = vmatprep.mubr.f32.mxu0 0.0
    %616 = vmatmul.mubr.f32.gmra.mrb[0].mxu0 %v261
    %v617 = vpop.f32.mrb[0].mxu0
    %v618 = vadd.f32 %v153, %v617
    %v619 = vpop.f32.mrb[0].mxu0
    %v620 = vadd.f32 %v157, %v619
    %621 = vmatprep.mubr.f32.mxu0 0.0
    %622 = vmatmul.mubr.f32.gmra.mrb[0].mxu0 %v264
    %v623 = vpop.f32.mrb[0].mxu0
    %v624 = vadd.f32 %v153, %v623
    %v625 = vpop.f32.mrb[0].mxu0
    %v626 = vadd.f32 %v157, %v625
    %627 = vmatprep.mubr.f32.mxu0 0.0
    %628 = vmatmul.mubr.f32.gmra.mrb[0].mxu0 %v267
    %v629 = vpop.f32.mrb[0].mxu0
    %v630 = vadd.f32 %v153, %v629
    %v631 = vpop.f32.mrb[0].mxu0
    %v632 = vadd.f32 %v157, %v631
    %633 = vmatprep.mubr.f32.mxu0 0.0
    %634 = vmatmul.mubr.f32.gmra.mrb[0].mxu0 %v270
    %v635 = vpop.f32.mrb[0].mxu0
    %v636 = vadd.f32 %v153, %v635
    %v637 = vpop.f32.mrb[0].mxu0
    %v638 = vadd.f32 %v157, %v637
    %639 = vmatprep.mubr.f32.mxu0 0.0
    %640 = vmatmul.mubr.f32.gmra.mrb[0].mxu0 %v273
    %v641 = vpop.f32.mrb[0].mxu0
    %v642 = vadd.f32 %v153, %v641
    %v643 = vpop.f32.mrb[0].mxu0
    %v644 = vadd.f32 %v157, %v643
    %645 = vmatprep.mubr.f32.mxu0 0.0
    %646 = vmatmul.mubr.f32.gmra.mrb[0].mxu0 %v276
    %v647 = vpop.f32.mrb[0].mxu0
    %v648 = vadd.f32 %v153, %v647
    %v649 = vpop.f32.mrb[0].mxu0
    %v650 = vadd.f32 %v157, %v649
    %651 = vmatprep.mubr.f32.mxu0 0.0
    %652 = vmatmul.mubr.f32.gmra.mrb[0].mxu0 %v279
    %v653 = vpop.f32.mrb[0].mxu0
    %v654 = vadd.f32 %v153, %v653
    %v655 = vpop.f32.mrb[0].mxu0
    %v656 = vadd.f32 %v157, %v655
    %657 = vmatprep.mubr.f32.mxu0 0.0
    %658 = vmatmul.mubr.f32.gmra.mrb[0].mxu0 %v282
    %v659 = vpop.f32.mrb[0].mxu0
    %v660 = vadd.f32 %v153, %v659
    %v661 = vpop.f32.mrb[0].mxu0
    %v662 = vadd.f32 %v157, %v661
    %663 = vmatprep.mubr.f32.mxu0 0.0
    %664 = vmatmul.mubr.f32.gmra.mrb[0].mxu0 %v285
    %v665 = vpop.f32.mrb[0].mxu0
    %v666 = vadd.f32 %v153, %v665
    %v667 = vpop.f32.mrb[0].mxu0
    %v668 = vadd.f32 %v157, %v667
    %669 = vmatprep.mubr.f32.mxu0 0.0
    %670 = vmatmul.mubr.f32.gmra.mrb[0].mxu0 %v288
    %v671 = vpop.f32.mrb[0].mxu0
    %v672 = vadd.f32 %v153, %v671
    %v673 = vpop.f32.mrb[0].mxu0
    %v674 = vadd.f32 %v157, %v673
    %675 = vmatprep.mubr.f32.mxu0 0.0
    %676 = vmatmul.mubr.f32.gmra.mrb[0].mxu0 %v291
    %v677 = vpop.f32.mrb[0].mxu0
    %v678 = vadd.f32 %v153, %v677
    %v679 = vpop.f32.mrb[0].mxu0
    %v680 = vadd.f32 %v157, %v679
    %681 = vmatprep.mubr.f32.mxu0 0.0
    %682 = vmatmul.mubr.f32.gmra.mrb[0].mxu0 %v294
    %v683 = vpop.f32.mrb[0].mxu0
    %v684 = vadd.f32 %v153, %v683
    %v685 = vpop.f32.mrb[0].mxu0
    %v686 = vadd.f32 %v157, %v685
    %687 = vmatprep.mubr.f32.mxu0 0.0
    %688 = vmatmul.mubr.f32.gmra.mrb[0].mxu0 %v297
    %v689 = vpop.f32.mrb[0].mxu0
    %v690 = vadd.f32 %v153, %v689
    %v691 = vpop.f32.mrb[0].mxu0
    %v692 = vadd.f32 %v157, %v691
    %693 = vmatprep.mubr.f32.mxu0 0.0
    %694 = vmatmul.mubr.f32.gmra.mrb[0].mxu0 %v300
    %v695 = vpop.f32.mrb[0].mxu0
    %v696 = vadd.f32 %v153, %v695
    %v697 = vpop.f32.mrb[0].mxu0
    %v698 = vadd.f32 %v157, %v697
    %699 = vmatprep.mubr.f32.mxu0 0.0
    %700 = vmatmul.mubr.f32.gmra.mrb[0].mxu0 %v303
    %v701 = vpop.f32.mrb[0].mxu0
    %v702 = vadd.f32 %v153, %v701
    %v703 = vpop.f32.mrb[0].mxu0
    %v704 = vadd.f32 %v157, %v703
    %705 = vmatprep.mubr.f32.mxu0 0.0
    %706 = vmatmul.mubr.f32.gmra.mrb[0].mxu0 %v306
    %v707 = vpop.f32.mrb[0].mxu0
    %v708 = vadd.f32 %v153, %v707
    %v709 = vpop.f32.mrb[0].mxu0
    %v710 = vadd.f32 %v157, %v709
    %711 = vmatprep.mubr.f32.mxu0 0.0
    %712 = vmatmul.mubr.f32.gmra.mrb[0].mxu0 %v309
    %v713 = vpop.f32.mrb[0].mxu0
    %v714 = vadd.f32 %v153, %v713
    %v715 = vpop.f32.mrb[0].mxu0
    %v716 = vadd.f32 %v157, %v715
    %717 = vmatprep.mubr.f32.mxu0 0.0
    %718 = vmatmul.mubr.f32.gmra.mrb[0].mxu0 %v312
    %v719 = vpop.f32.mrb[0].mxu0
    %v720 = vadd.f32 %v153, %v719
    %v721 = vpop.f32.mrb[0].mxu0
    %v722 = vadd.f32 %v157, %v721
    %723 = vmatprep.mubr.f32.mxu0 0.0
    %724 = vmatmul.mubr.f32.gmra.mrb[0].mxu0 %v315
    %v725 = vpop.f32.mrb[0].mxu0
    %v726 = vadd.f32 %v153, %v725
    %v727 = vpop.f32.mrb[0].mxu0
    %v728 = vadd.f32 %v157, %v727
    %729 = vmatprep.mubr.f32.mxu0 0.0
    %730 = vmatmul.mubr.f32.gmra.mrb[0].mxu0 %v318
    %v731 = vpop.f32.mrb[0].mxu0
    %v732 = vadd.f32 %v153, %v731
    %v733 = vpop.f32.mrb[0].mxu0
    %v734 = vadd.f32 %v157, %v733
    %735 = vmatprep.mubr.f32.mxu0 0.0
    %736 = vmatmul.mubr.f32.gmra.mrb[0].mxu0 %v321
    %v737 = vpop.f32.mrb[0].mxu0
    %v738 = vadd.f32 %v153, %v737
    %v739 = vpop.f32.mrb[0].mxu0
    %v740 = vadd.f32 %v157, %v739
    %741 = vmatprep.mubr.f32.mxu0 0.0
    %742 = vmatmul.mubr.f32.gmra.mrb[0].mxu0 %v324
    %v743 = vpop.f32.mrb[0].mxu0
    %v744 = vadd.f32 %v153, %v743
    %v745 = vpop.f32.mrb[0].mxu0
    %v746 = vadd.f32 %v157, %v745
    %747 = vmatprep.mubr.f32.mxu0 0.0
    %748 = vmatmul.mubr.f32.gmra.mrb[0].mxu0 %v327
    %v749 = vpop.f32.mrb[0].mxu0
    %v750 = vadd.f32 %v153, %v749
    %v751 = vpop.f32.mrb[0].mxu0
    %v752 = vadd.f32 %v157, %v751
    %753 = vmatprep.mubr.f32.mxu0 0.0
    %754 = vmatmul.mubr.f32.gmra.mrb[0].mxu0 %v330
    %v755 = vpop.f32.mrb[0].mxu0
    %v756 = vadd.f32 %v153, %v755
    %v757 = vpop.f32.mrb[0].mxu0
    %v758 = vadd.f32 %v157, %v757
    %759 = vmatprep.mubr.f32.mxu0 0.0
    %760 = vmatmul.mubr.f32.gmra.mrb[0].mxu0 %v333
    %v761 = vpop.f32.mrb[0].mxu0
    %v762 = vadd.f32 %v153, %v761
    %v763 = vpop.f32.mrb[0].mxu0
    %v764 = vadd.f32 %v157, %v763
    %765 = vmatprep.mubr.f32.mxu0 0.0
    %766 = vmatmul.mubr.f32.gmra.mrb[0].mxu0 %v336
    %v767 = vpop.f32.mrb[0].mxu0
    %v768 = vadd.f32 %v153, %v767
    %v769 = vpop.f32.mrb[0].mxu0
    %v770 = vadd.f32 %v157, %v769
    %771 = vmatprep.mubr.f32.mxu0 0.0
    %772 = vmatmul.mubr.f32.gmra.mrb[0].mxu0 %v339
    %v773 = vpop.f32.mrb[0].mxu0
    %v774 = vadd.f32 %v153, %v773
    %v775 = vpop.f32.mrb[0].mxu0
    %v776 = vadd.f32 %v157, %v775
    %777 = vmatprep.mubr.f32.mxu0 0.0
    %778 = vmatmul.mubr.f32.gmra.mrb[0].mxu0 %v342
    %v779 = vpop.f32.mrb[0].mxu0
    %v780 = vadd.f32 %v153, %v779
    %v781 = vpop.f32.mrb[0].mxu0
    %v782 = vadd.f32 %v157, %v781
    %783 = vmatprep.mubr.f32.mxu0 0.0
    %784 = vmatmul.mubr.f32.gmra.mrb[0].mxu0 %v345
    %v785 = vpop.f32.mrb[0].mxu0
    %v786 = vadd.f32 %v153, %v785
    %v787 = vpop.f32.mrb[0].mxu0
    %v788 = vadd.f32 %v157, %v787
    %789 = vmatprep.mubr.f32.mxu0 0.0
    %790 = vmatmul.mubr.f32.gmra.mrb[0].mxu0 %v348
    %v791 = vpop.f32.mrb[0].mxu0
    %v792 = vadd.f32 %v153, %v791
    %v793 = vpop.f32.mrb[0].mxu0
    %v794 = vadd.f32 %v157, %v793
    %795 = vmatprep.mubr.f32.mxu0 0.0
    %796 = vmatmul.mubr.f32.gmra.mrb[0].mxu0 %v351
    %v797 = vpop.f32.mrb[0].mxu0
    %v798 = vadd.f32 %v153, %v797
    %v799 = vpop.f32.mrb[0].mxu0
    %v800 = vadd.f32 %v157, %v799
    %801 = vdwg.mxu0
    %802 = vst [vmem:[%s6] sm:$0xff] %v420
    %803 = vst [vmem:[%s6 + $0x8] sm:$0xff] %v422
    %804 = vst [vmem:[%s6 + $0x10] sm:$0xff] %v426
    %805 = vst [vmem:[%s6 + $0x18] sm:$0xff] %v428
    %806 = vst [vmem:[%s6 + $0x20] sm:$0xff] %v432
    %807 = vst [vmem:[%s6 + $0x28] sm:$0xff] %v434
    %808 = vst [vmem:[%s6 + $0x30] sm:$0xff] %v438
    %809 = vst [vmem:[%s6 + $0x38] sm:$0xff] %v440
    %810 = vst [vmem:[%s6 + $0x40] sm:$0xff] %v444
    %811 = vst [vmem:[%s6 + $0x48] sm:$0xff] %v446
    %812 = vst [vmem:[%s6 + $0x50] sm:$0xff] %v450
    %813 = vst [vmem:[%s6 + $0x58] sm:$0xff] %v452
    %814 = vst [vmem:[%s6 + $0x60] sm:$0xff] %v456
    %815 = vst [vmem:[%s6 + $0x68] sm:$0xff] %v458
    %816 = vst [vmem:[%s6 + $0x70] sm:$0xff] %v462
    %817 = vst [vmem:[%s6 + $0x78] sm:$0xff] %v464
    %818 = vst [vmem:[%s6 + $0x80] sm:$0xff] %v468
    %819 = vst [vmem:[%s6 + $0x88] sm:$0xff] %v470
    %820 = vst [vmem:[%s6 + $0x90] sm:$0xff] %v474
    %821 = vst [vmem:[%s6 + $0x98] sm:$0xff] %v476
    %822 = vst [vmem:[%s6 + $0xa0] sm:$0xff] %v480
    %823 = vst [vmem:[%s6 + $0xa8] sm:$0xff] %v482
    %824 = vst [vmem:[%s6 + $0xb0] sm:$0xff] %v486
    %825 = vst [vmem:[%s6 + $0xb8] sm:$0xff] %v488
    %826 = vst [vmem:[%s6 + $0xc0] sm:$0xff] %v492
    %827 = vst [vmem:[%s6 + $0xc8] sm:$0xff] %v494
    %828 = vst [vmem:[%s6 + $0xd0] sm:$0xff] %v498
    %829 = vst [vmem:[%s6 + $0xd8] sm:$0xff] %v500
    %830 = vst [vmem:[%s6 + $0xe0] sm:$0xff] %v504
    %831 = vst [vmem:[%s6 + $0xe8] sm:$0xff] %v506
    %832 = vst [vmem:[%s6 + $0xf0] sm:$0xff] %v510
    %833 = vst [vmem:[%s6 + $0xf8] sm:$0xff] %v512
    %834 = vst [vmem:[%s6 + $0x100] sm:$0xff] %v516
    %835 = vst [vmem:[%s6 + $0x108] sm:$0xff] %v518
    %836 = vst [vmem:[%s6 + $0x110] sm:$0xff] %v522
    %837 = vst [vmem:[%s6 + $0x118] sm:$0xff] %v524
    %838 = vst [vmem:[%s6 + $0x120] sm:$0xff] %v528
    %839 = vst [vmem:[%s6 + $0x128] sm:$0xff] %v530
    %840 = vst [vmem:[%s6 + $0x130] sm:$0xff] %v534
    %841 = vst [vmem:[%s6 + $0x138] sm:$0xff] %v536
    %842 = vst [vmem:[%s6 + $0x140] sm:$0xff] %v540
    %843 = vst [vmem:[%s6 + $0x148] sm:$0xff] %v542
    %844 = vst [vmem:[%s6 + $0x150] sm:$0xff] %v546
    %845 = vst [vmem:[%s6 + $0x158] sm:$0xff] %v548
    %846 = vst [vmem:[%s6 + $0x160] sm:$0xff] %v552
    %847 = vst [vmem:[%s6 + $0x168] sm:$0xff] %v554
    %848 = vst [vmem:[%s6 + $0x170] sm:$0xff] %v558
    %849 = vst [vmem:[%s6 + $0x178] sm:$0xff] %v560
    %850 = vst [vmem:[%s6 + $0x180] sm:$0xff] %v564
    %851 = vst [vmem:[%s6 + $0x188] sm:$0xff] %v566
    %852 = vst [vmem:[%s6 + $0x190] sm:$0xff] %v570
    %853 = vst [vmem:[%s6 + $0x198] sm:$0xff] %v572
    %854 = vst [vmem:[%s6 + $0x1a0] sm:$0xff] %v576
    %855 = vst [vmem:[%s6 + $0x1a8] sm:$0xff] %v578
    %856 = vst [vmem:[%s6 + $0x1b0] sm:$0xff] %v582
    %857 = vst [vmem:[%s6 + $0x1b8] sm:$0xff] %v584
    %858 = vst [vmem:[%s6 + $0x1c0] sm:$0xff] %v588
    %859 = vst [vmem:[%s6 + $0x1c8] sm:$0xff] %v590
    %860 = vst [vmem:[%s6 + $0x1d0] sm:$0xff] %v594
    %861 = vst [vmem:[%s6 + $0x1d8] sm:$0xff] %v596
    %862 = vst [vmem:[%s6 + $0x1e0] sm:$0xff] %v600
    %863 = vst [vmem:[%s6 + $0x1e8] sm:$0xff] %v602
    %864 = vst [vmem:[%s6 + $0x1f0] sm:$0xff] %v606
    %865 = vst [vmem:[%s6 + $0x1f8] sm:$0xff] %v608
    %866 = vst [vmem:[%s6 + $0x200] sm:$0xff] %v612
    %867 = vst [vmem:[%s6 + $0x208] sm:$0xff] %v614
    %868 = vst [vmem:[%s6 + $0x210] sm:$0xff] %v618
    %869 = vst [vmem:[%s6 + $0x218] sm:$0xff] %v620
    %870 = vst [vmem:[%s6 + $0x220] sm:$0xff] %v624
    %871 = vst [vmem:[%s6 + $0x228] sm:$0xff] %v626
    %872 = vst [vmem:[%s6 + $0x230] sm:$0xff] %v630
    %873 = vst [vmem:[%s6 + $0x238] sm:$0xff] %v632
    %874 = vst [vmem:[%s6 + $0x240] sm:$0xff] %v636
    %875 = vst [vmem:[%s6 + $0x248] sm:$0xff] %v638
    %876 = vst [vmem:[%s6 + $0x250] sm:$0xff] %v642
    %877 = vst [vmem:[%s6 + $0x258] sm:$0xff] %v644
    %878 = vst [vmem:[%s6 + $0x260] sm:$0xff] %v648
    %879 = vst [vmem:[%s6 + $0x268] sm:$0xff] %v650
    %880 = vst [vmem:[%s6 + $0x270] sm:$0xff] %v654
    %881 = vst [vmem:[%s6 + $0x278] sm:$0xff] %v656
    %882 = vst [vmem:[%s6 + $0x280] sm:$0xff] %v660
    %883 = vst [vmem:[%s6 + $0x288] sm:$0xff] %v662
    %884 = vst [vmem:[%s6 + $0x290] sm:$0xff] %v666
    %885 = vst [vmem:[%s6 + $0x298] sm:$0xff] %v668
    %886 = vst [vmem:[%s6 + $0x2a0] sm:$0xff] %v672
    %887 = vst [vmem:[%s6 + $0x2a8] sm:$0xff] %v674
    %888 = vst [vmem:[%s6 + $0x2b0] sm:$0xff] %v678
    %889 = vst [vmem:[%s6 + $0x2b8] sm:$0xff] %v680
    %890 = vst [vmem:[%s6 + $0x2c0] sm:$0xff] %v684
    %891 = vst [vmem:[%s6 + $0x2c8] sm:$0xff] %v686
    %892 = vst [vmem:[%s6 + $0x2d0] sm:$0xff] %v690
    %893 = vst [vmem:[%s6 + $0x2d8] sm:$0xff] %v692
    %894 = vst [vmem:[%s6 + $0x2e0] sm:$0xff] %v696
    %895 = vst [vmem:[%s6 + $0x2e8] sm:$0xff] %v698
    %896 = vst [vmem:[%s6 + $0x2f0] sm:$0xff] %v702
    %897 = vst [vmem:[%s6 + $0x2f8] sm:$0xff] %v704
    %898 = vst [vmem:[%s6 + $0x300] sm:$0xff] %v708
    %899 = vst [vmem:[%s6 + $0x308] sm:$0xff] %v710
    %900 = vst [vmem:[%s6 + $0x310] sm:$0xff] %v714
    %901 = vst [vmem:[%s6 + $0x318] sm:$0xff] %v716
    %902 = vst [vmem:[%s6 + $0x320] sm:$0xff] %v720
    %903 = vst [vmem:[%s6 + $0x328] sm:$0xff] %v722
    %904 = vst [vmem:[%s6 + $0x330] sm:$0xff] %v726
    %905 = vst [vmem:[%s6 + $0x338] sm:$0xff] %v728
    %906 = vst [vmem:[%s6 + $0x340] sm:$0xff] %v732
    %907 = vst [vmem:[%s6 + $0x348] sm:$0xff] %v734
    %908 = vst [vmem:[%s6 + $0x350] sm:$0xff] %v738
    %909 = vst [vmem:[%s6 + $0x358] sm:$0xff] %v740
    %910 = vst [vmem:[%s6 + $0x360] sm:$0xff] %v744
    %911 = vst [vmem:[%s6 + $0x368] sm:$0xff] %v746
    %912 = vst [vmem:[%s6 + $0x370] sm:$0xff] %v750
    %913 = vst [vmem:[%s6 + $0x378] sm:$0xff] %v752
    %914 = vst [vmem:[%s6 + $0x380] sm:$0xff] %v756
    %915 = vst [vmem:[%s6 + $0x388] sm:$0xff] %v758
    %916 = vst [vmem:[%s6 + $0x390] sm:$0xff] %v762
    %917 = vst [vmem:[%s6 + $0x398] sm:$0xff] %v764
    %918 = vst [vmem:[%s6 + $0x3a0] sm:$0xff] %v768
    %919 = vst [vmem:[%s6 + $0x3a8] sm:$0xff] %v770
    %920 = vst [vmem:[%s6 + $0x3b0] sm:$0xff] %v774
    %921 = vst [vmem:[%s6 + $0x3b8] sm:$0xff] %v776
    %922 = vst [vmem:[%s6 + $0x3c0] sm:$0xff] %v780
    %923 = vst [vmem:[%s6 + $0x3c8] sm:$0xff] %v782
    %924 = vst [vmem:[%s6 + $0x3d0] sm:$0xff] %v786
    %925 = vst [vmem:[%s6 + $0x3d8] sm:$0xff] %v788
    %926 = vst [vmem:[%s6 + $0x3e0] sm:$0xff] %v792
    %927 = vst [vmem:[%s6 + $0x3e8] sm:$0xff] %v794
    %928 = vst [vmem:[%s6 + $0x3f0] sm:$0xff] %v798
    %929 = vst [vmem:[%s6 + $0x3f8] sm:$0xff] %v800
    %v930 = vld [vmem:[%s3] sm:$0xff]
    %v931 = vld [vmem:[%s3 + $0x8] sm:$0xff]
    %v932 = vld [vmem:[%s3 + $0x10] sm:$0xff]
    %v933 = vld [vmem:[%s3 + $0x18] sm:$0xff]
    %v934 = vld [vmem:[%s3 + $0x20] sm:$0xff]
    %v935 = vld [vmem:[%s3 + $0x28] sm:$0xff]
    %v936 = vld [vmem:[%s3 + $0x30] sm:$0xff]
    %v937 = vld [vmem:[%s3 + $0x38] sm:$0xff]
    %v938 = vld [vmem:[%s3 + $0x40] sm:$0xff]
    %v939 = vld [vmem:[%s3 + $0x48] sm:$0xff]
    %v940 = vld [vmem:[%s3 + $0x50] sm:$0xff]
    %v941 = vld [vmem:[%s3 + $0x58] sm:$0xff]
    %v942 = vld [vmem:[%s3 + $0x60] sm:$0xff]
    %v943 = vld [vmem:[%s3 + $0x68] sm:$0xff]
    %v944 = vld [vmem:[%s3 + $0x70] sm:$0xff]
    %v945 = vld [vmem:[%s3 + $0x78] sm:$0xff]
    %v946 = vld [vmem:[%s3 + $0x80] sm:$0xff]
    %v947 = vld [vmem:[%s3 + $0x88] sm:$0xff]
    %v948 = vld [vmem:[%s3 + $0x90] sm:$0xff]
    %v949 = vld [vmem:[%s3 + $0x98] sm:$0xff]
    %v950 = vld [vmem:[%s3 + $0xa0] sm:$0xff]
    %v951 = vld [vmem:[%s3 + $0xa8] sm:$0xff]
    %v952 = vld [vmem:[%s3 + $0xb0] sm:$0xff]
    %v953 = vld [vmem:[%s3 + $0xb8] sm:$0xff]
    %v954 = vld [vmem:[%s3 + $0xc0] sm:$0xff]
    %v955 = vld [vmem:[%s3 + $0xc8] sm:$0xff]
    %v956 = vld [vmem:[%s3 + $0xd0] sm:$0xff]
    %v957 = vld [vmem:[%s3 + $0xd8] sm:$0xff]
    %v958 = vld [vmem:[%s3 + $0xe0] sm:$0xff]
    %v959 = vld [vmem:[%s3 + $0xe8] sm:$0xff]
    %v960 = vld [vmem:[%s3 + $0xf0] sm:$0xff]
    %v961 = vld [vmem:[%s3 + $0xf8] sm:$0xff]
    %v962 = vld [vmem:[%s3 + $0x100] sm:$0xff]
    %v963 = vld [vmem:[%s3 + $0x108] sm:$0xff]
    %v964 = vld [vmem:[%s3 + $0x110] sm:$0xff]
    %v965 = vld [vmem:[%s3 + $0x118] sm:$0xff]
    %v966 = vld [vmem:[%s3 + $0x120] sm:$0xff]
    %v967 = vld [vmem:[%s3 + $0x128] sm:$0xff]
    %v968 = vld [vmem:[%s3 + $0x130] sm:$0xff]
    %v969 = vld [vmem:[%s3 + $0x138] sm:$0xff]
    %v970 = vld [vmem:[%s3 + $0x140] sm:$0xff]
    %v971 = vld [vmem:[%s3 + $0x148] sm:$0xff]
    %v972 = vld [vmem:[%s3 + $0x150] sm:$0xff]
    %v973 = vld [vmem:[%s3 + $0x158] sm:$0xff]
    %v974 = vld [vmem:[%s3 + $0x160] sm:$0xff]
    %v975 = vld [vmem:[%s3 + $0x168] sm:$0xff]
    %v976 = vld [vmem:[%s3 + $0x170] sm:$0xff]
    %v977 = vld [vmem:[%s3 + $0x178] sm:$0xff]
    %v978 = vld [vmem:[%s3 + $0x180] sm:$0xff]
    %v979 = vld [vmem:[%s3 + $0x188] sm:$0xff]
    %v980 = vld [vmem:[%s3 + $0x190] sm:$0xff]
    %v981 = vld [vmem:[%s3 + $0x198] sm:$0xff]
    %v982 = vld [vmem:[%s3 + $0x1a0] sm:$0xff]
    %v983 = vld [vmem:[%s3 + $0x1a8] sm:$0xff]
    %v984 = vld [vmem:[%s3 + $0x1b0] sm:$0xff]
    %v985 = vld [vmem:[%s3 + $0x1b8] sm:$0xff]
    %v986 = vld [vmem:[%s3 + $0x1c0] sm:$0xff]
    %v987 = vld [vmem:[%s3 + $0x1c8] sm:$0xff]
    %v988 = vld [vmem:[%s3 + $0x1d0] sm:$0xff]
    %v989 = vld [vmem:[%s3 + $0x1d8] sm:$0xff]
    %v990 = vld [vmem:[%s3 + $0x1e0] sm:$0xff]
    %v991 = vld [vmem:[%s3 + $0x1e8] sm:$0xff]
    %v992 = vld [vmem:[%s3 + $0x1f0] sm:$0xff]
    %v993 = vld [vmem:[%s3 + $0x1f8] sm:$0xff]
    %v994 = vld [vmem:[%s4] sm:$0xff]
    %v995 = vld [vmem:[%s4 + $0x8] sm:$0xff]
    %v996 = vld [vmem:[%s4 + $0x10] sm:$0xff]
    %v997 = vld [vmem:[%s4 + $0x18] sm:$0xff]
    %v998 = vld [vmem:[%s4 + $0x20] sm:$0xff]
    %v999 = vld [vmem:[%s4 + $0x28] sm:$0xff]
    %v1000 = vld [vmem:[%s4 + $0x30] sm:$0xff]
    %v1001 = vld [vmem:[%s4 + $0x38] sm:$0xff]
    %v1002 = vld [vmem:[%s4 + $0x40] sm:$0xff]
    %v1003 = vld [vmem:[%s4 + $0x48] sm:$0xff]
    %v1004 = vld [vmem:[%s4 + $0x50] sm:$0xff]
    %v1005 = vld [vmem:[%s4 + $0x58] sm:$0xff]
    %v1006 = vld [vmem:[%s4 + $0x60] sm:$0xff]
    %v1007 = vld [vmem:[%s4 + $0x68] sm:$0xff]
    %v1008 = vld [vmem:[%s4 + $0x70] sm:$0xff]
    %v1009 = vld [vmem:[%s4 + $0x78] sm:$0xff]
    %v1010 = vld [vmem:[%s4 + $0x80] sm:$0xff]
    %v1011 = vld [vmem:[%s4 + $0x88] sm:$0xff]
    %v1012 = vld [vmem:[%s4 + $0x90] sm:$0xff]
    %v1013 = vld [vmem:[%s4 + $0x98] sm:$0xff]
    %v1014 = vld [vmem:[%s4 + $0xa0] sm:$0xff]
    %v1015 = vld [vmem:[%s4 + $0xa8] sm:$0xff]
    %v1016 = vld [vmem:[%s4 + $0xb0] sm:$0xff]
    %v1017 = vld [vmem:[%s4 + $0xb8] sm:$0xff]
    %v1018 = vld [vmem:[%s4 + $0xc0] sm:$0xff]
    %v1019 = vld [vmem:[%s4 + $0xc8] sm:$0xff]
    %v1020 = vld [vmem:[%s4 + $0xd0] sm:$0xff]
    %v1021 = vld [vmem:[%s4 + $0xd8] sm:$0xff]
    %v1022 = vld [vmem:[%s4 + $0xe0] sm:$0xff]
    %v1023 = vld [vmem:[%s4 + $0xe8] sm:$0xff]
    %v1024 = vld [vmem:[%s4 + $0xf0] sm:$0xff]
    %v1025 = vld [vmem:[%s4 + $0xf8] sm:$0xff]
    %v1026 = vld [vmem:[%s4 + $0x100] sm:$0xff]
    %v1027 = vld [vmem:[%s4 + $0x108] sm:$0xff]
    %v1028 = vld [vmem:[%s4 + $0x110] sm:$0xff]
    %v1029 = vld [vmem:[%s4 + $0x118] sm:$0xff]
    %v1030 = vld [vmem:[%s4 + $0x120] sm:$0xff]
    %v1031 = vld [vmem:[%s4 + $0x128] sm:$0xff]
    %v1032 = vld [vmem:[%s4 + $0x130] sm:$0xff]
    %v1033 = vld [vmem:[%s4 + $0x138] sm:$0xff]
    %v1034 = vld [vmem:[%s4 + $0x140] sm:$0xff]
    %v1035 = vld [vmem:[%s4 + $0x148] sm:$0xff]
    %v1036 = vld [vmem:[%s4 + $0x150] sm:$0xff]
    %v1037 = vld [vmem:[%s4 + $0x158] sm:$0xff]
    %v1038 = vld [vmem:[%s4 + $0x160] sm:$0xff]
    %v1039 = vld [vmem:[%s4 + $0x168] sm:$0xff]
    %v1040 = vld [vmem:[%s4 + $0x170] sm:$0xff]
    %v1041 = vld [vmem:[%s4 + $0x178] sm:$0xff]
    %v1042 = vld [vmem:[%s4 + $0x180] sm:$0xff]
    %v1043 = vld [vmem:[%s4 + $0x188] sm:$0xff]
    %v1044 = vld [vmem:[%s4 + $0x190] sm:$0xff]
    %v1045 = vld [vmem:[%s4 + $0x198] sm:$0xff]
    %v1046 = vld [vmem:[%s4 + $0x1a0] sm:$0xff]
    %v1047 = vld [vmem:[%s4 + $0x1a8] sm:$0xff]
    %v1048 = vld [vmem:[%s4 + $0x1b0] sm:$0xff]
    %v1049 = vld [vmem:[%s4 + $0x1b8] sm:$0xff]
    %v1050 = vld [vmem:[%s4 + $0x1c0] sm:$0xff]
    %v1051 = vld [vmem:[%s4 + $0x1c8] sm:$0xff]
    %v1052 = vld [vmem:[%s4 + $0x1d0] sm:$0xff]
    %v1053 = vld [vmem:[%s4 + $0x1d8] sm:$0xff]
    %v1054 = vld [vmem:[%s4 + $0x1e0] sm:$0xff]
    %v1055 = vld [vmem:[%s4 + $0x1e8] sm:$0xff]
    %v1056 = vld [vmem:[%s4 + $0x1f0] sm:$0xff]
    %v1057 = vld [vmem:[%s4 + $0x1f8] sm:$0xff]
    %v1058 = vld [vmem:[#allocation7] sm:$0x1]
    %v1059 = vlaneseq
    %v1060 = vshrl.u32 %v1059, 7
    %v1061 = vsub.s32 0, %v1060
    %v1062 = vrot.slane %v1058, %v1061
    %vm1063 = vcmp.gt.f32.partialorder %v1062, 0.5
    %v1064 = vld [vmem:[#allocation7 + $0x1] sm:$0x1]
    %v1065 = vlaneseq
    %v1066 = vshrl.u32 %v1065, 7
    %v1067 = vsub.s32 0, %v1066
    %v1068 = vrot.slane %v1064, %v1067
    %vm1069 = vcmp.gt.f32.partialorder %v1068, 0.5
    %v1070 = vmul.f32 %v420, %v930
    %v1071 = vmul.f32 %v426, %v931
    %v1072 = vmul.f32 %v432, %v932
    %v1073 = vmul.f32 %v438, %v933
    %v1074 = vmul.f32 %v444, %v934
    %v1075 = vmul.f32 %v450, %v935
    %v1076 = vmul.f32 %v456, %v936
    %v1077 = vmul.f32 %v462, %v937
    %v1078 = vmul.f32 %v468, %v938
    %v1079 = vmul.f32 %v474, %v939
    %v1080 = vmul.f32 %v480, %v940
    %v1081 = vmul.f32 %v486, %v941
    %v1082 = vmul.f32 %v492, %v942
    %v1083 = vmul.f32 %v498, %v943
    %v1084 = vmul.f32 %v504, %v944
    %v1085 = vmul.f32 %v510, %v945
    %v1086 = vmul.f32 %v516, %v946
    %v1087 = vmul.f32 %v522, %v947
    %v1088 = vmul.f32 %v528, %v948
    %v1089 = vmul.f32 %v534, %v949
    %v1090 = vmul.f32 %v540, %v950
    %v1091 = vmul.f32 %v546, %v951
    %v1092 = vmul.f32 %v552, %v952
    %v1093 = vmul.f32 %v558, %v953
    %v1094 = vmul.f32 %v564, %v954
    %v1095 = vmul.f32 %v570, %v955
    %v1096 = vmul.f32 %v576, %v956
    %v1097 = vmul.f32 %v582, %v957
    %v1098 = vmul.f32 %v588, %v958
    %v1099 = vmul.f32 %v594, %v959
    %v1100 = vmul.f32 %v600, %v960
    %v1101 = vmul.f32 %v606, %v961
    %v1102 = vmul.f32 %v612, %v962
    %v1103 = vmul.f32 %v618, %v963
    %v1104 = vmul.f32 %v624, %v964
    %v1105 = vmul.f32 %v630, %v965
    %v1106 = vmul.f32 %v636, %v966
    %v1107 = vmul.f32 %v642, %v967
    %v1108 = vmul.f32 %v648, %v968
    %v1109 = vmul.f32 %v654, %v969
    %v1110 = vmul.f32 %v660, %v970
    %v1111 = vmul.f32 %v666, %v971
    %v1112 = vmul.f32 %v672, %v972
    %v1113 = vmul.f32 %v678, %v973
    %v1114 = vmul.f32 %v684, %v974
    %v1115 = vmul.f32 %v690, %v975
    %v1116 = vmul.f32 %v696, %v976
    %v1117 = vmul.f32 %v702, %v977
    %v1118 = vmul.f32 %v708, %v978
    %v1119 = vmul.f32 %v714, %v979
    %v1120 = vmul.f32 %v720, %v980
    %v1121 = vmul.f32 %v726, %v981
    %v1122 = vmul.f32 %v732, %v982
    %v1123 = vmul.f32 %v738, %v983
    %v1124 = vmul.f32 %v744, %v984
    %v1125 = vmul.f32 %v750, %v985
    %v1126 = vmul.f32 %v756, %v986
    %v1127 = vmul.f32 %v762, %v987
    %v1128 = vmul.f32 %v768, %v988
    %v1129 = vmul.f32 %v774, %v989
    %v1130 = vmul.f32 %v780, %v990
    %v1131 = vmul.f32 %v786, %v991
    %v1132 = vmul.f32 %v792, %v992
    %v1133 = vmul.f32 %v798, %v993
    %v1134 = vadd.f32 %v1070, %v994
    %v1135 = vadd.f32 %v1071, %v995
    %v1136 = vadd.f32 %v1072, %v996
    %v1137 = vadd.f32 %v1073, %v997
    %v1138 = vadd.f32 %v1074, %v998
    %v1139 = vadd.f32 %v1075, %v999
    %v1140 = vadd.f32 %v1076, %v1000
    %v1141 = vadd.f32 %v1077, %v1001
    %v1142 = vadd.f32 %v1078, %v1002
    %v1143 = vadd.f32 %v1079, %v1003
    %v1144 = vadd.f32 %v1080, %v1004
    %v1145 = vadd.f32 %v1081, %v1005
    %v1146 = vadd.f32 %v1082, %v1006
    %v1147 = vadd.f32 %v1083, %v1007
    %v1148 = vadd.f32 %v1084, %v1008
    %v1149 = vadd.f32 %v1085, %v1009
    %v1150 = vadd.f32 %v1086, %v1010
    %v1151 = vadd.f32 %v1087, %v1011
    %v1152 = vadd.f32 %v1088, %v1012
    %v1153 = vadd.f32 %v1089, %v1013
    %v1154 = vadd.f32 %v1090, %v1014
    %v1155 = vadd.f32 %v1091, %v1015
    %v1156 = vadd.f32 %v1092, %v1016
    %v1157 = vadd.f32 %v1093, %v1017
    %v1158 = vadd.f32 %v1094, %v1018
    %v1159 = vadd.f32 %v1095, %v1019
    %v1160 = vadd.f32 %v1096, %v1020
    %v1161 = vadd.f32 %v1097, %v1021
    %v1162 = vadd.f32 %v1098, %v1022
    %v1163 = vadd.f32 %v1099, %v1023
    %v1164 = vadd.f32 %v1100, %v1024
    %v1165 = vadd.f32 %v1101, %v1025
    %v1166 = vadd.f32 %v1102, %v1026
    %v1167 = vadd.f32 %v1103, %v1027
    %v1168 = vadd.f32 %v1104, %v1028
    %v1169 = vadd.f32 %v1105, %v1029
    %v1170 = vadd.f32 %v1106, %v1030
    %v1171 = vadd.f32 %v1107, %v1031
    %v1172 = vadd.f32 %v1108, %v1032
    %v1173 = vadd.f32 %v1109, %v1033
    %v1174 = vadd.f32 %v1110, %v1034
    %v1175 = vadd.f32 %v1111, %v1035
    %v1176 = vadd.f32 %v1112, %v1036
    %v1177 = vadd.f32 %v1113, %v1037
    %v1178 = vadd.f32 %v1114, %v1038
    %v1179 = vadd.f32 %v1115, %v1039
    %v1180 = vadd.f32 %v1116, %v1040
    %v1181 = vadd.f32 %v1117, %v1041
    %v1182 = vadd.f32 %v1118, %v1042
    %v1183 = vadd.f32 %v1119, %v1043
    %v1184 = vadd.f32 %v1120, %v1044
    %v1185 = vadd.f32 %v1121, %v1045
    %v1186 = vadd.f32 %v1122, %v1046
    %v1187 = vadd.f32 %v1123, %v1047
    %v1188 = vadd.f32 %v1124, %v1048
    %v1189 = vadd.f32 %v1125, %v1049
    %v1190 = vadd.f32 %v1126, %v1050
    %v1191 = vadd.f32 %v1127, %v1051
    %v1192 = vadd.f32 %v1128, %v1052
    %v1193 = vadd.f32 %v1129, %v1053
    %v1194 = vadd.f32 %v1130, %v1054
    %v1195 = vadd.f32 %v1131, %v1055
    %v1196 = vadd.f32 %v1132, %v1056
    %v1197 = vadd.f32 %v1133, %v1057
    %v1198 = vmul.f32 %v420, 1.442695
    %v1199 = vpow.pop %v1198
    %v1200 = vmul.f32 %v426, 1.442695
    %v1201 = vpow.pop %v1200
    %v1202 = vmul.f32 %v432, 1.442695
    %v1203 = vpow.pop %v1202
    %v1204 = vmul.f32 %v438, 1.442695
    %v1205 = vpow.pop %v1204
    %v1206 = vmul.f32 %v444, 1.442695
    %v1207 = vpow.pop %v1206
    %v1208 = vmul.f32 %v450, 1.442695
    %v1209 = vpow.pop %v1208
    %v1210 = vmul.f32 %v456, 1.442695
    %v1211 = vpow.pop %v1210
    %v1212 = vmul.f32 %v462, 1.442695
    %v1213 = vpow.pop %v1212
    %v1214 = vmul.f32 %v468, 1.442695
    %v1215 = vpow.pop %v1214
    %v1216 = vmul.f32 %v474, 1.442695
    %v1217 = vpow.pop %v1216
    %v1218 = vmul.f32 %v480, 1.442695
    %v1219 = vpow.pop %v1218
    %v1220 = vmul.f32 %v486, 1.442695
    %v1221 = vpow.pop %v1220
    %v1222 = vmul.f32 %v492, 1.442695
    %v1223 = vpow.pop %v1222
    %v1224 = vmul.f32 %v498, 1.442695
    %v1225 = vpow.pop %v1224
    %v1226 = vmul.f32 %v504, 1.442695
    %v1227 = vpow.pop %v1226
    %v1228 = vmul.f32 %v510, 1.442695
    %v1229 = vpow.pop %v1228
    %v1230 = vmul.f32 %v516, 1.442695
    %v1231 = vpow.pop %v1230
    %v1232 = vmul.f32 %v522, 1.442695
    %v1233 = vpow.pop %v1232
    %v1234 = vmul.f32 %v528, 1.442695
    %v1235 = vpow.pop %v1234
    %v1236 = vmul.f32 %v534, 1.442695
    %v1237 = vpow.pop %v1236
    %v1238 = vmul.f32 %v540, 1.442695
    %v1239 = vpow.pop %v1238
    %v1240 = vmul.f32 %v546, 1.442695
    %v1241 = vpow.pop %v1240
    %v1242 = vmul.f32 %v552, 1.442695
    %v1243 = vpow.pop %v1242
    %v1244 = vmul.f32 %v558, 1.442695
    %v1245 = vpow.pop %v1244
    %v1246 = vmul.f32 %v564, 1.442695
    %v1247 = vpow.pop %v1246
    %v1248 = vmul.f32 %v570, 1.442695
    %v1249 = vpow.pop %v1248
    %v1250 = vmul.f32 %v576, 1.442695
    %v1251 = vpow.pop %v1250
    %v1252 = vmul.f32 %v582, 1.442695
    %v1253 = vpow.pop %v1252
    %v1254 = vmul.f32 %v588, 1.442695
    %v1255 = vpow.pop %v1254
    %v1256 = vmul.f32 %v594, 1.442695
    %v1257 = vpow.pop %v1256
    %v1258 = vmul.f32 %v600, 1.442695
    %v1259 = vpow.pop %v1258
    %v1260 = vmul.f32 %v606, 1.442695
    %v1261 = vpow.pop %v1260
    %v1262 = vmul.f32 %v612, 1.442695
    %v1263 = vpow.pop %v1262
    %v1264 = vmul.f32 %v618, 1.442695
    %v1265 = vpow.pop %v1264
    %v1266 = vmul.f32 %v624, 1.442695
    %v1267 = vpow.pop %v1266
    %v1268 = vmul.f32 %v630, 1.442695
    %v1269 = vpow.pop %v1268
    %v1270 = vmul.f32 %v636, 1.442695
    %v1271 = vpow.pop %v1270
    %v1272 = vmul.f32 %v642, 1.442695
    %v1273 = vpow.pop %v1272
    %v1274 = vmul.f32 %v648, 1.442695
    %v1275 = vpow.pop %v1274
    %v1276 = vmul.f32 %v654, 1.442695
    %v1277 = vpow.pop %v1276
    %v1278 = vmul.f32 %v660, 1.442695
    %v1279 = vpow.pop %v1278
    %v1280 = vmul.f32 %v666, 1.442695
    %v1281 = vpow.pop %v1280
    %v1282 = vmul.f32 %v672, 1.442695
    %v1283 = vpow.pop %v1282
    %v1284 = vmul.f32 %v678, 1.442695
    %v1285 = vpow.pop %v1284
    %v1286 = vmul.f32 %v684, 1.442695
    %v1287 = vpow.pop %v1286
    %v1288 = vmul.f32 %v690, 1.442695
    %v1289 = vpow.pop %v1288
    %v1290 = vmul.f32 %v696, 1.442695
    %v1291 = vpow.pop %v1290
    %v1292 = vmul.f32 %v702, 1.442695
    %v1293 = vpow.pop %v1292
    %v1294 = vmul.f32 %v708, 1.442695
    %v1295 = vpow.pop %v1294
    %v1296 = vmul.f32 %v714, 1.442695
    %v1297 = vpow.pop %v1296
    %v1298 = vmul.f32 %v720, 1.442695
    %v1299 = vpow.pop %v1298
    %v1300 = vmul.f32 %v726, 1.442695
    %v1301 = vpow.pop %v1300
    %v1302 = vmul.f32 %v732, 1.442695
    %v1303 = vpow.pop %v1302
    %v1304 = vmul.f32 %v738, 1.442695
    %v1305 = vpow.pop %v1304
    %v1306 = vmul.f32 %v744, 1.442695
    %v1307 = vpow.pop %v1306
    %v1308 = vmul.f32 %v750, 1.442695
    %v1309 = vpow.pop %v1308
    %v1310 = vmul.f32 %v756, 1.442695
    %v1311 = vpow.pop %v1310
    %v1312 = vmul.f32 %v762, 1.442695
    %v1313 = vpow.pop %v1312
    %v1314 = vmul.f32 %v768, 1.442695
    %v1315 = vpow.pop %v1314
    %v1316 = vmul.f32 %v774, 1.442695
    %v1317 = vpow.pop %v1316
    %v1318 = vmul.f32 %v780, 1.442695
    %v1319 = vpow.pop %v1318
    %v1320 = vmul.f32 %v786, 1.442695
    %v1321 = vpow.pop %v1320
    %v1322 = vmul.f32 %v792, 1.442695
    %v1323 = vpow.pop %v1322
    %v1324 = vmul.f32 %v798, 1.442695
    %v1325 = vpow.pop %v1324
    %v1326 = vmul.f32 %v1199, %v930
    %v1327 = vmul.f32 %v1201, %v931
    %v1328 = vmul.f32 %v1203, %v932
    %v1329 = vmul.f32 %v1205, %v933
    %v1330 = vmul.f32 %v1207, %v934
    %v1331 = vmul.f32 %v1209, %v935
    %v1332 = vmul.f32 %v1211, %v936
    %v1333 = vmul.f32 %v1213, %v937
    %v1334 = vmul.f32 %v1215, %v938
    %v1335 = vmul.f32 %v1217, %v939
    %v1336 = vmul.f32 %v1219, %v940
    %v1337 = vmul.f32 %v1221, %v941
    %v1338 = vmul.f32 %v1223, %v942
    %v1339 = vmul.f32 %v1225, %v943
    %v1340 = vmul.f32 %v1227, %v944
    %v1341 = vmul.f32 %v1229, %v945
    %v1342 = vmul.f32 %v1231, %v946
    %v1343 = vmul.f32 %v1233, %v947
    %v1344 = vmul.f32 %v1235, %v948
    %v1345 = vmul.f32 %v1237, %v949
    %v1346 = vmul.f32 %v1239, %v950
    %v1347 = vmul.f32 %v1241, %v951
    %v1348 = vmul.f32 %v1243, %v952
    %v1349 = vmul.f32 %v1245, %v953
    %v1350 = vmul.f32 %v1247, %v954
    %v1351 = vmul.f32 %v1249, %v955
    %v1352 = vmul.f32 %v1251, %v956
    %v1353 = vmul.f32 %v1253, %v957
    %v1354 = vmul.f32 %v1255, %v958
    %v1355 = vmul.f32 %v1257, %v959
    %v1356 = vmul.f32 %v1259, %v960
    %v1357 = vmul.f32 %v1261, %v961
    %v1358 = vmul.f32 %v1263, %v962
    %v1359 = vmul.f32 %v1265, %v963
    %v1360 = vmul.f32 %v1267, %v964
    %v1361 = vmul.f32 %v1269, %v965
    %v1362 = vmul.f32 %v1271, %v966
    %v1363 = vmul.f32 %v1273, %v967
    %v1364 = vmul.f32 %v1275, %v968
    %v1365 = vmul.f32 %v1277, %v969
    %v1366 = vmul.f32 %v1279, %v970
    %v1367 = vmul.f32 %v1281, %v971
    %v1368 = vmul.f32 %v1283, %v972
    %v1369 = vmul.f32 %v1285, %v973
    %v1370 = vmul.f32 %v1287, %v974
    %v1371 = vmul.f32 %v1289, %v975
    %v1372 = vmul.f32 %v1291, %v976
    %v1373 = vmul.f32 %v1293, %v977
    %v1374 = vmul.f32 %v1295, %v978
    %v1375 = vmul.f32 %v1297, %v979
    %v1376 = vmul.f32 %v1299, %v980
    %v1377 = vmul.f32 %v1301, %v981
    %v1378 = vmul.f32 %v1303, %v982
    %v1379 = vmul.f32 %v1305, %v983
    %v1380 = vmul.f32 %v1307, %v984
    %v1381 = vmul.f32 %v1309, %v985
    %v1382 = vmul.f32 %v1311, %v986
    %v1383 = vmul.f32 %v1313, %v987
    %v1384 = vmul.f32 %v1315, %v988
    %v1385 = vmul.f32 %v1317, %v989
    %v1386 = vmul.f32 %v1319, %v990
    %v1387 = vmul.f32 %v1321, %v991
    %v1388 = vmul.f32 %v1323, %v992
    %v1389 = vmul.f32 %v1325, %v993
    %v1390 = vsel %vm1063, %v1326, %v1134
    %v1391 = vsel %vm1063, %v1327, %v1135
    %v1392 = vsel %vm1063, %v1328, %v1136
    %v1393 = vsel %vm1063, %v1329, %v1137
    %v1394 = vsel %vm1063, %v1330, %v1138
    %v1395 = vsel %vm1063, %v1331, %v1139
    %v1396 = vsel %vm1063, %v1332, %v1140
    %v1397 = vsel %vm1063, %v1333, %v1141
    %v1398 = vsel %vm1063, %v1334, %v1142
    %v1399 = vsel %vm1063, %v1335, %v1143
    %v1400 = vsel %vm1063, %v1336, %v1144
    %v1401 = vsel %vm1063, %v1337, %v1145
    %v1402 = vsel %vm1063, %v1338, %v1146
    %v1403 = vsel %vm1063, %v1339, %v1147
    %v1404 = vsel %vm1063, %v1340, %v1148
    %v1405 = vsel %vm1063, %v1341, %v1149
    %v1406 = vsel %vm1063, %v1342, %v1150
    %v1407 = vsel %vm1063, %v1343, %v1151
    %v1408 = vsel %vm1063, %v1344, %v1152
    %v1409 = vsel %vm1063, %v1345, %v1153
    %v1410 = vsel %vm1063, %v1346, %v1154
    %v1411 = vsel %vm1063, %v1347, %v1155
    %v1412 = vsel %vm1063, %v1348, %v1156
    %v1413 = vsel %vm1063, %v1349, %v1157
    %v1414 = vsel %vm1063, %v1350, %v1158
    %v1415 = vsel %vm1063, %v1351, %v1159
    %v1416 = vsel %vm1063, %v1352, %v1160
    %v1417 = vsel %vm1063, %v1353, %v1161
    %v1418 = vsel %vm1063, %v1354, %v1162
    %v1419 = vsel %vm1063, %v1355, %v1163
    %v1420 = vsel %vm1063, %v1356, %v1164
    %v1421 = vsel %vm1063, %v1357, %v1165
    %v1422 = vsel %vm1063, %v1358, %v1166
    %v1423 = vsel %vm1063, %v1359, %v1167
    %v1424 = vsel %vm1063, %v1360, %v1168
    %v1425 = vsel %vm1063, %v1361, %v1169
    %v1426 = vsel %vm1063, %v1362, %v1170
    %v1427 = vsel %vm1063, %v1363, %v1171
    %v1428 = vsel %vm1063, %v1364, %v1172
    %v1429 = vsel %vm1063, %v1365, %v1173
    %v1430 = vsel %vm1063, %v1366, %v1174
    %v1431 = vsel %vm1063, %v1367, %v1175
    %v1432 = vsel %vm1063, %v1368, %v1176
    %v1433 = vsel %vm1063, %v1369, %v1177
    %v1434 = vsel %vm1063, %v1370, %v1178
    %v1435 = vsel %vm1063, %v1371, %v1179
    %v1436 = vsel %vm1063, %v1372, %v1180
    %v1437 = vsel %vm1063, %v1373, %v1181
    %v1438 = vsel %vm1063, %v1374, %v1182
    %v1439 = vsel %vm1063, %v1375, %v1183
    %v1440 = vsel %vm1063, %v1376, %v1184
    %v1441 = vsel %vm1063, %v1377, %v1185
    %v1442 = vsel %vm1063, %v1378, %v1186
    %v1443 = vsel %vm1063, %v1379, %v1187
    %v1444 = vsel %vm1063, %v1380, %v1188
    %v1445 = vsel %vm1063, %v1381, %v1189
    %v1446 = vsel %vm1063, %v1382, %v1190
    %v1447 = vsel %vm1063, %v1383, %v1191
    %v1448 = vsel %vm1063, %v1384, %v1192
    %v1449 = vsel %vm1063, %v1385, %v1193
    %v1450 = vsel %vm1063, %v1386, %v1194
    %v1451 = vsel %vm1063, %v1387, %v1195
    %v1452 = vsel %vm1063, %v1388, %v1196
    %v1453 = vsel %vm1063, %v1389, %v1197
    %v1454 = vsub.f32 %v1390, 0.78539
    %v1455 = vsub.f32 %v1391, 0.78539
    %v1456 = vsub.f32 %v1392, 0.78539
    %v1457 = vsub.f32 %v1393, 0.78539
    %v1458 = vsub.f32 %v1394, 0.78539
    %v1459 = vsub.f32 %v1395, 0.78539
    %v1460 = vsub.f32 %v1396, 0.78539
    %v1461 = vsub.f32 %v1397, 0.78539
    %v1462 = vsub.f32 %v1398, 0.78539
    %v1463 = vsub.f32 %v1399, 0.78539
    %v1464 = vsub.f32 %v1400, 0.78539
    %v1465 = vsub.f32 %v1401, 0.78539
    %v1466 = vsub.f32 %v1402, 0.78539
    %v1467 = vsub.f32 %v1403, 0.78539
    %v1468 = vsub.f32 %v1404, 0.78539
    %v1469 = vsub.f32 %v1405, 0.78539
    %v1470 = vsub.f32 %v1406, 0.78539
    %v1471 = vsub.f32 %v1407, 0.78539
    %v1472 = vsub.f32 %v1408, 0.78539
    %v1473 = vsub.f32 %v1409, 0.78539
    %v1474 = vsub.f32 %v1410, 0.78539
    %v1475 = vsub.f32 %v1411, 0.78539
    %v1476 = vsub.f32 %v1412, 0.78539
    %v1477 = vsub.f32 %v1413, 0.78539
    %v1478 = vsub.f32 %v1414, 0.78539
    %v1479 = vsub.f32 %v1415, 0.78539
    %v1480 = vsub.f32 %v1416, 0.78539
    %v1481 = vsub.f32 %v1417, 0.78539
    %v1482 = vsub.f32 %v1418, 0.78539
    %v1483 = vsub.f32 %v1419, 0.78539
    %v1484 = vsub.f32 %v1420, 0.78539
    %v1485 = vsub.f32 %v1421, 0.78539
    %v1486 = vsub.f32 %v1422, 0.78539
    %v1487 = vsub.f32 %v1423, 0.78539
    %v1488 = vsub.f32 %v1424, 0.78539
    %v1489 = vsub.f32 %v1425, 0.78539
    %v1490 = vsub.f32 %v1426, 0.78539
    %v1491 = vsub.f32 %v1427, 0.78539
    %v1492 = vsub.f32 %v1428, 0.78539
    %v1493 = vsub.f32 %v1429, 0.78539
    %v1494 = vsub.f32 %v1430, 0.78539
    %v1495 = vsub.f32 %v1431, 0.78539
    %v1496 = vsub.f32 %v1432, 0.78539
    %v1497 = vsub.f32 %v1433, 0.78539
    %v1498 = vsub.f32 %v1434, 0.78539
    %v1499 = vsub.f32 %v1435, 0.78539
    %v1500 = vsub.f32 %v1436, 0.78539
    %v1501 = vsub.f32 %v1437, 0.78539
    %v1502 = vsub.f32 %v1438, 0.78539
    %v1503 = vsub.f32 %v1439, 0.78539
    %v1504 = vsub.f32 %v1440, 0.78539
    %v1505 = vsub.f32 %v1441, 0.78539
    %v1506 = vsub.f32 %v1442, 0.78539
    %v1507 = vsub.f32 %v1443, 0.78539
    %v1508 = vsub.f32 %v1444, 0.78539
    %v1509 = vsub.f32 %v1445, 0.78539
    %v1510 = vsub.f32 %v1446, 0.78539
    %v1511 = vsub.f32 %v1447, 0.78539
    %v1512 = vsub.f32 %v1448, 0.78539
    %v1513 = vsub.f32 %v1449, 0.78539
    %v1514 = vsub.f32 %v1450, 0.78539
    %v1515 = vsub.f32 %v1451, 0.78539
    %v1516 = vsub.f32 %v1452, 0.78539
    %v1517 = vsub.f32 %v1453, 0.78539
    %v1518 = vmul.f32 %v1454, 0.31830987
    %v1519 = vmul.f32 %v1455, 0.31830987
    %v1520 = vmul.f32 %v1456, 0.31830987
    %v1521 = vmul.f32 %v1457, 0.31830987
    %v1522 = vmul.f32 %v1458, 0.31830987
    %v1523 = vmul.f32 %v1459, 0.31830987
    %v1524 = vmul.f32 %v1460, 0.31830987
    %v1525 = vmul.f32 %v1461, 0.31830987
    %v1526 = vmul.f32 %v1462, 0.31830987
    %v1527 = vmul.f32 %v1463, 0.31830987
    %v1528 = vmul.f32 %v1464, 0.31830987
    %v1529 = vmul.f32 %v1465, 0.31830987
    %v1530 = vmul.f32 %v1466, 0.31830987
    %v1531 = vmul.f32 %v1467, 0.31830987
    %v1532 = vmul.f32 %v1468, 0.31830987
    %v1533 = vmul.f32 %v1469, 0.31830987
    %v1534 = vmul.f32 %v1470, 0.31830987
    %v1535 = vmul.f32 %v1471, 0.31830987
    %v1536 = vmul.f32 %v1472, 0.31830987
    %v1537 = vmul.f32 %v1473, 0.31830987
    %v1538 = vmul.f32 %v1474, 0.31830987
    %v1539 = vmul.f32 %v1475, 0.31830987
    %v1540 = vmul.f32 %v1476, 0.31830987
    %v1541 = vmul.f32 %v1477, 0.31830987
    %v1542 = vmul.f32 %v1478, 0.31830987
    %v1543 = vmul.f32 %v1479, 0.31830987
    %v1544 = vmul.f32 %v1480, 0.31830987
    %v1545 = vmul.f32 %v1481, 0.31830987
    %v1546 = vmul.f32 %v1482, 0.31830987
    %v1547 = vmul.f32 %v1483, 0.31830987
    %v1548 = vmul.f32 %v1484, 0.31830987
    %v1549 = vmul.f32 %v1485, 0.31830987
    %v1550 = vmul.f32 %v1486, 0.31830987
    %v1551 = vmul.f32 %v1487, 0.31830987
    %v1552 = vmul.f32 %v1488, 0.31830987
    %v1553 = vmul.f32 %v1489, 0.31830987
    %v1554 = vmul.f32 %v1490, 0.31830987
    %v1555 = vmul.f32 %v1491, 0.31830987
    %v1556 = vmul.f32 %v1492, 0.31830987
    %v1557 = vmul.f32 %v1493, 0.31830987
    %v1558 = vmul.f32 %v1494, 0.31830987
    %v1559 = vmul.f32 %v1495, 0.31830987
    %v1560 = vmul.f32 %v1496, 0.31830987
    %v1561 = vmul.f32 %v1497, 0.31830987
    %v1562 = vmul.f32 %v1498, 0.31830987
    %v1563 = vmul.f32 %v1499, 0.31830987
    %v1564 = vmul.f32 %v1500, 0.31830987
    %v1565 = vmul.f32 %v1501, 0.31830987
    %v1566 = vmul.f32 %v1502, 0.31830987
    %v1567 = vmul.f32 %v1503, 0.31830987
    %v1568 = vmul.f32 %v1504, 0.31830987
    %v1569 = vmul.f32 %v1505, 0.31830987
    %v1570 = vmul.f32 %v1506, 0.31830987
    %v1571 = vmul.f32 %v1507, 0.31830987
    %v1572 = vmul.f32 %v1508, 0.31830987
    %v1573 = vmul.f32 %v1509, 0.31830987
    %v1574 = vmul.f32 %v1510, 0.31830987
    %v1575 = vmul.f32 %v1511, 0.31830987
    %v1576 = vmul.f32 %v1512, 0.31830987
    %v1577 = vmul.f32 %v1513, 0.31830987
    %v1578 = vmul.f32 %v1514, 0.31830987
    %v1579 = vmul.f32 %v1515, 0.31830987
    %v1580 = vmul.f32 %v1516, 0.31830987
    %v1581 = vmul.f32 %v1517, 0.31830987
    %v1582 = vadd.f32 %v1518, 0.0
    %v1583 = vadd.f32 %v1519, 0.0
    %v1584 = vadd.f32 %v1520, 0.0
    %v1585 = vadd.f32 %v1521, 0.0
    %v1586 = vadd.f32 %v1522, 0.0
    %v1587 = vadd.f32 %v1523, 0.0
    %v1588 = vadd.f32 %v1524, 0.0
    %v1589 = vadd.f32 %v1525, 0.0
    %v1590 = vadd.f32 %v1526, 0.0
    %v1591 = vadd.f32 %v1527, 0.0
    %v1592 = vadd.f32 %v1528, 0.0
    %v1593 = vadd.f32 %v1529, 0.0
    %v1594 = vadd.f32 %v1530, 0.0
    %v1595 = vadd.f32 %v1531, 0.0
    %v1596 = vadd.f32 %v1532, 0.0
    %v1597 = vadd.f32 %v1533, 0.0
    %v1598 = vadd.f32 %v1534, 0.0
    %v1599 = vadd.f32 %v1535, 0.0
    %v1600 = vadd.f32 %v1536, 0.0
    %v1601 = vadd.f32 %v1537, 0.0
    %v1602 = vadd.f32 %v1538, 0.0
    %v1603 = vadd.f32 %v1539, 0.0
    %v1604 = vadd.f32 %v1540, 0.0
    %v1605 = vadd.f32 %v1541, 0.0
    %v1606 = vadd.f32 %v1542, 0.0
    %v1607 = vadd.f32 %v1543, 0.0
    %v1608 = vadd.f32 %v1544, 0.0
    %v1609 = vadd.f32 %v1545, 0.0
    %v1610 = vadd.f32 %v1546, 0.0
    %v1611 = vadd.f32 %v1547, 0.0
    %v1612 = vadd.f32 %v1548, 0.0
    %v1613 = vadd.f32 %v1549, 0.0
    %v1614 = vadd.f32 %v1550, 0.0
    %v1615 = vadd.f32 %v1551, 0.0
    %v1616 = vadd.f32 %v1552, 0.0
    %v1617 = vadd.f32 %v1553, 0.0
    %v1618 = vadd.f32 %v1554, 0.0
    %v1619 = vadd.f32 %v1555, 0.0
    %v1620 = vadd.f32 %v1556, 0.0
    %v1621 = vadd.f32 %v1557, 0.0
    %v1622 = vadd.f32 %v1558, 0.0
    %v1623 = vadd.f32 %v1559, 0.0
    %v1624 = vadd.f32 %v1560, 0.0
    %v1625 = vadd.f32 %v1561, 0.0
    %v1626 = vadd.f32 %v1562, 0.0
    %v1627 = vadd.f32 %v1563, 0.0
    %v1628 = vadd.f32 %v1564, 0.0
    %v1629 = vadd.f32 %v1565, 0.0
    %v1630 = vadd.f32 %v1566, 0.0
    %v1631 = vadd.f32 %v1567, 0.0
    %v1632 = vadd.f32 %v1568, 0.0
    %v1633 = vadd.f32 %v1569, 0.0
    %v1634 = vadd.f32 %v1570, 0.0
    %v1635 = vadd.f32 %v1571, 0.0
    %v1636 = vadd.f32 %v1572, 0.0
    %v1637 = vadd.f32 %v1573, 0.0
    %v1638 = vadd.f32 %v1574, 0.0
    %v1639 = vadd.f32 %v1575, 0.0
    %v1640 = vadd.f32 %v1576, 0.0
    %v1641 = vadd.f32 %v1577, 0.0
    %v1642 = vadd.f32 %v1578, 0.0
    %v1643 = vadd.f32 %v1579, 0.0
    %v1644 = vadd.f32 %v1580, 0.0
    %v1645 = vadd.f32 %v1581, 0.0
    %v1646 = vfloor.f32 %v1582
    %v1647 = vfloor.f32 %v1583
    %v1648 = vfloor.f32 %v1584
    %v1649 = vfloor.f32 %v1585
    %v1650 = vfloor.f32 %v1586
    %v1651 = vfloor.f32 %v1587
    %v1652 = vfloor.f32 %v1588
    %v1653 = vfloor.f32 %v1589
    %v1654 = vfloor.f32 %v1590
    %v1655 = vfloor.f32 %v1591
    %v1656 = vfloor.f32 %v1592
    %v1657 = vfloor.f32 %v1593
    %v1658 = vfloor.f32 %v1594
    %v1659 = vfloor.f32 %v1595
    %v1660 = vfloor.f32 %v1596
    %v1661 = vfloor.f32 %v1597
    %v1662 = vfloor.f32 %v1598
    %v1663 = vfloor.f32 %v1599
    %v1664 = vfloor.f32 %v1600
    %v1665 = vfloor.f32 %v1601
    %v1666 = vfloor.f32 %v1602
    %v1667 = vfloor.f32 %v1603
    %v1668 = vfloor.f32 %v1604
    %v1669 = vfloor.f32 %v1605
    %v1670 = vfloor.f32 %v1606
    %v1671 = vfloor.f32 %v1607
    %v1672 = vfloor.f32 %v1608
    %v1673 = vfloor.f32 %v1609
    %v1674 = vfloor.f32 %v1610
    %v1675 = vfloor.f32 %v1611
    %v1676 = vfloor.f32 %v1612
    %v1677 = vfloor.f32 %v1613
    %v1678 = vfloor.f32 %v1614
    %v1679 = vfloor.f32 %v1615
    %v1680 = vfloor.f32 %v1616
    %v1681 = vfloor.f32 %v1617
    %v1682 = vfloor.f32 %v1618
    %v1683 = vfloor.f32 %v1619
    %v1684 = vfloor.f32 %v1620
    %v1685 = vfloor.f32 %v1621
    %v1686 = vfloor.f32 %v1622
    %v1687 = vfloor.f32 %v1623
    %v1688 = vfloor.f32 %v1624
    %v1689 = vfloor.f32 %v1625
    %v1690 = vfloor.f32 %v1626
    %v1691 = vfloor.f32 %v1627
    %v1692 = vfloor.f32 %v1628
    %v1693 = vfloor.f32 %v1629
    %v1694 = vfloor.f32 %v1630
    %v1695 = vfloor.f32 %v1631
    %v1696 = vfloor.f32 %v1632
    %v1697 = vfloor.f32 %v1633
    %v1698 = vfloor.f32 %v1634
    %v1699 = vfloor.f32 %v1635
    %v1700 = vfloor.f32 %v1636
    %v1701 = vfloor.f32 %v1637
    %v1702 = vfloor.f32 %v1638
    %v1703 = vfloor.f32 %v1639
    %v1704 = vfloor.f32 %v1640
    %v1705 = vfloor.f32 %v1641
    %v1706 = vfloor.f32 %v1642
    %v1707 = vfloor.f32 %v1643
    %v1708 = vfloor.f32 %v1644
    %v1709 = vfloor.f32 %v1645
    %v1710 = vmul.f32 %v1646, 3.1415927
    %v1711 = vmul.f32 %v1647, 3.1415927
    %v1712 = vmul.f32 %v1648, 3.1415927
    %v1713 = vmul.f32 %v1649, 3.1415927
    %v1714 = vmul.f32 %v1650, 3.1415927
    %v1715 = vmul.f32 %v1651, 3.1415927
    %v1716 = vmul.f32 %v1652, 3.1415927
    %v1717 = vmul.f32 %v1653, 3.1415927
    %v1718 = vmul.f32 %v1654, 3.1415927
    %v1719 = vmul.f32 %v1655, 3.1415927
    %v1720 = vmul.f32 %v1656, 3.1415927
    %v1721 = vmul.f32 %v1657, 3.1415927
    %v1722 = vmul.f32 %v1658, 3.1415927
    %v1723 = vmul.f32 %v1659, 3.1415927
    %v1724 = vmul.f32 %v1660, 3.1415927
    %v1725 = vmul.f32 %v1661, 3.1415927
    %v1726 = vmul.f32 %v1662, 3.1415927
    %v1727 = vmul.f32 %v1663, 3.1415927
    %v1728 = vmul.f32 %v1664, 3.1415927
    %v1729 = vmul.f32 %v1665, 3.1415927
    %v1730 = vmul.f32 %v1666, 3.1415927
    %v1731 = vmul.f32 %v1667, 3.1415927
    %v1732 = vmul.f32 %v1668, 3.1415927
    %v1733 = vmul.f32 %v1669, 3.1415927
    %v1734 = vmul.f32 %v1670, 3.1415927
    %v1735 = vmul.f32 %v1671, 3.1415927
    %v1736 = vmul.f32 %v1672, 3.1415927
    %v1737 = vmul.f32 %v1673, 3.1415927
    %v1738 = vmul.f32 %v1674, 3.1415927
    %v1739 = vmul.f32 %v1675, 3.1415927
    %v1740 = vmul.f32 %v1676, 3.1415927
    %v1741 = vmul.f32 %v1677, 3.1415927
    %v1742 = vmul.f32 %v1678, 3.1415927
    %v1743 = vmul.f32 %v1679, 3.1415927
    %v1744 = vmul.f32 %v1680, 3.1415927
    %v1745 = vmul.f32 %v1681, 3.1415927
    %v1746 = vmul.f32 %v1682, 3.1415927
    %v1747 = vmul.f32 %v1683, 3.1415927
    %v1748 = vmul.f32 %v1684, 3.1415927
    %v1749 = vmul.f32 %v1685, 3.1415927
    %v1750 = vmul.f32 %v1686, 3.1415927
    %v1751 = vmul.f32 %v1687, 3.1415927
    %v1752 = vmul.f32 %v1688, 3.1415927
    %v1753 = vmul.f32 %v1689, 3.1415927
    %v1754 = vmul.f32 %v1690, 3.1415927
    %v1755 = vmul.f32 %v1691, 3.1415927
    %v1756 = vmul.f32 %v1692, 3.1415927
    %v1757 = vmul.f32 %v1693, 3.1415927
    %v1758 = vmul.f32 %v1694, 3.1415927
    %v1759 = vmul.f32 %v1695, 3.1415927
    %v1760 = vmul.f32 %v1696, 3.1415927
    %v1761 = vmul.f32 %v1697, 3.1415927
    %v1762 = vmul.f32 %v1698, 3.1415927
    %v1763 = vmul.f32 %v1699, 3.1415927
    %v1764 = vmul.f32 %v1700, 3.1415927
    %v1765 = vmul.f32 %v1701, 3.1415927
    %v1766 = vmul.f32 %v1702, 3.1415927
    %v1767 = vmul.f32 %v1703, 3.1415927
    %v1768 = vmul.f32 %v1704, 3.1415927
    %v1769 = vmul.f32 %v1705, 3.1415927
    %v1770 = vmul.f32 %v1706, 3.1415927
    %v1771 = vmul.f32 %v1707, 3.1415927
    %v1772 = vmul.f32 %v1708, 3.1415927
    %v1773 = vmul.f32 %v1709, 3.1415927
    %v1774 = vsub.f32 %v1454, %v1710
    %v1775 = vsub.f32 %v1455, %v1711
    %v1776 = vsub.f32 %v1456, %v1712
    %v1777 = vsub.f32 %v1457, %v1713
    %v1778 = vsub.f32 %v1458, %v1714
    %v1779 = vsub.f32 %v1459, %v1715
    %v1780 = vsub.f32 %v1460, %v1716
    %v1781 = vsub.f32 %v1461, %v1717
    %v1782 = vsub.f32 %v1462, %v1718
    %v1783 = vsub.f32 %v1463, %v1719
    %v1784 = vsub.f32 %v1464, %v1720
    %v1785 = vsub.f32 %v1465, %v1721
    %v1786 = vsub.f32 %v1466, %v1722
    %v1787 = vsub.f32 %v1467, %v1723
    %v1788 = vsub.f32 %v1468, %v1724
    %v1789 = vsub.f32 %v1469, %v1725
    %v1790 = vsub.f32 %v1470, %v1726
    %v1791 = vsub.f32 %v1471, %v1727
    %v1792 = vsub.f32 %v1472, %v1728
    %v1793 = vsub.f32 %v1473, %v1729
    %v1794 = vsub.f32 %v1474, %v1730
    %v1795 = vsub.f32 %v1475, %v1731
    %v1796 = vsub.f32 %v1476, %v1732
    %v1797 = vsub.f32 %v1477, %v1733
    %v1798 = vsub.f32 %v1478, %v1734
    %v1799 = vsub.f32 %v1479, %v1735
    %v1800 = vsub.f32 %v1480, %v1736
    %v1801 = vsub.f32 %v1481, %v1737
    %v1802 = vsub.f32 %v1482, %v1738
    %v1803 = vsub.f32 %v1483, %v1739
    %v1804 = vsub.f32 %v1484, %v1740
    %v1805 = vsub.f32 %v1485, %v1741
    %v1806 = vsub.f32 %v1486, %v1742
    %v1807 = vsub.f32 %v1487, %v1743
    %v1808 = vsub.f32 %v1488, %v1744
    %v1809 = vsub.f32 %v1489, %v1745
    %v1810 = vsub.f32 %v1490, %v1746
    %v1811 = vsub.f32 %v1491, %v1747
    %v1812 = vsub.f32 %v1492, %v1748
    %v1813 = vsub.f32 %v1493, %v1749
    %v1814 = vsub.f32 %v1494, %v1750
    %v1815 = vsub.f32 %v1495, %v1751
    %v1816 = vsub.f32 %v1496, %v1752
    %v1817 = vsub.f32 %v1497, %v1753
    %v1818 = vsub.f32 %v1498, %v1754
    %v1819 = vsub.f32 %v1499, %v1755
    %v1820 = vsub.f32 %v1500, %v1756
    %v1821 = vsub.f32 %v1501, %v1757
    %v1822 = vsub.f32 %v1502, %v1758
    %v1823 = vsub.f32 %v1503, %v1759
    %v1824 = vsub.f32 %v1504, %v1760
    %v1825 = vsub.f32 %v1505, %v1761
    %v1826 = vsub.f32 %v1506, %v1762
    %v1827 = vsub.f32 %v1507, %v1763
    %v1828 = vsub.f32 %v1508, %v1764
    %v1829 = vsub.f32 %v1509, %v1765
    %v1830 = vsub.f32 %v1510, %v1766
    %v1831 = vsub.f32 %v1511, %v1767
    %v1832 = vsub.f32 %v1512, %v1768
    %v1833 = vsub.f32 %v1513, %v1769
    %v1834 = vsub.f32 %v1514, %v1770
    %v1835 = vsub.f32 %v1515, %v1771
    %v1836 = vsub.f32 %v1516, %v1772
    %v1837 = vsub.f32 %v1517, %v1773
    %vm1838 = vcmp.gt.f32.partialorder %v422, 0.0
    %vm1839 = vcmp.gt.f32.partialorder %v428, 0.0
    %vm1840 = vcmp.gt.f32.partialorder %v434, 0.0
    %vm1841 = vcmp.gt.f32.partialorder %v440, 0.0
    %vm1842 = vcmp.gt.f32.partialorder %v446, 0.0
    %vm1843 = vcmp.gt.f32.partialorder %v452, 0.0
    %vm1844 = vcmp.gt.f32.partialorder %v458, 0.0
    %vm1845 = vcmp.gt.f32.partialorder %v464, 0.0
    %vm1846 = vcmp.gt.f32.partialorder %v470, 0.0
    %vm1847 = vcmp.gt.f32.partialorder %v476, 0.0
    %vm1848 = vcmp.gt.f32.partialorder %v482, 0.0
    %vm1849 = vcmp.gt.f32.partialorder %v488, 0.0
    %vm1850 = vcmp.gt.f32.partialorder %v494, 0.0
    %vm1851 = vcmp.gt.f32.partialorder %v500, 0.0
    %vm1852 = vcmp.gt.f32.partialorder %v506, 0.0
    %vm1853 = vcmp.gt.f32.partialorder %v512, 0.0
    %vm1854 = vcmp.gt.f32.partialorder %v518, 0.0
    %vm1855 = vcmp.gt.f32.partialorder %v524, 0.0
    %vm1856 = vcmp.gt.f32.partialorder %v530, 0.0
    %vm1857 = vcmp.gt.f32.partialorder %v536, 0.0
    %vm1858 = vcmp.gt.f32.partialorder %v542, 0.0
    %vm1859 = vcmp.gt.f32.partialorder %v548, 0.0
    %vm1860 = vcmp.gt.f32.partialorder %v554, 0.0
    %vm1861 = vcmp.gt.f32.partialorder %v560, 0.0
    %vm1862 = vcmp.gt.f32.partialorder %v566, 0.0
    %vm1863 = vcmp.gt.f32.partialorder %v572, 0.0
    %vm1864 = vcmp.gt.f32.partialorder %v578, 0.0
    %vm1865 = vcmp.gt.f32.partialorder %v584, 0.0
    %vm1866 = vcmp.gt.f32.partialorder %v590, 0.0
    %vm1867 = vcmp.gt.f32.partialorder %v596, 0.0
    %vm1868 = vcmp.gt.f32.partialorder %v602, 0.0
    %vm1869 = vcmp.gt.f32.partialorder %v608, 0.0
    %vm1870 = vcmp.gt.f32.partialorder %v614, 0.0
    %vm1871 = vcmp.gt.f32.partialorder %v620, 0.0
    %vm1872 = vcmp.gt.f32.partialorder %v626, 0.0
    %vm1873 = vcmp.gt.f32.partialorder %v632, 0.0
    %vm1874 = vcmp.gt.f32.partialorder %v638, 0.0
    %vm1875 = vcmp.gt.f32.partialorder %v644, 0.0
    %vm1876 = vcmp.gt.f32.partialorder %v650, 0.0
    %vm1877 = vcmp.gt.f32.partialorder %v656, 0.0
    %vm1878 = vcmp.gt.f32.partialorder %v662, 0.0
    %vm1879 = vcmp.gt.f32.partialorder %v668, 0.0
    %vm1880 = vcmp.gt.f32.partialorder %v674, 0.0
    %vm1881 = vcmp.gt.f32.partialorder %v680, 0.0
    %vm1882 = vcmp.gt.f32.partialorder %v686, 0.0
    %vm1883 = vcmp.gt.f32.partialorder %v692, 0.0
    %vm1884 = vcmp.gt.f32.partialorder %v698, 0.0
    %vm1885 = vcmp.gt.f32.partialorder %v704, 0.0
    %vm1886 = vcmp.gt.f32.partialorder %v710, 0.0
    %vm1887 = vcmp.gt.f32.partialorder %v716, 0.0
    %vm1888 = vcmp.gt.f32.partialorder %v722, 0.0
    %vm1889 = vcmp.gt.f32.partialorder %v728, 0.0
    %vm1890 = vcmp.gt.f32.partialorder %v734, 0.0
    %vm1891 = vcmp.gt.f32.partialorder %v740, 0.0
    %vm1892 = vcmp.gt.f32.partialorder %v746, 0.0
    %vm1893 = vcmp.gt.f32.partialorder %v752, 0.0
    %vm1894 = vcmp.gt.f32.partialorder %v758, 0.0
    %vm1895 = vcmp.gt.f32.partialorder %v764, 0.0
    %vm1896 = vcmp.gt.f32.partialorder %v770, 0.0
    %vm1897 = vcmp.gt.f32.partialorder %v776, 0.0
    %vm1898 = vcmp.gt.f32.partialorder %v782, 0.0
    %vm1899 = vcmp.gt.f32.partialorder %v788, 0.0
    %vm1900 = vcmp.gt.f32.partialorder %v794, 0.0
    %vm1901 = vcmp.gt.f32.partialorder %v800, 0.0
    %v1902 = vsel %vm1838, 1.0, 0.0
    %v1903 = vsel %vm1839, 1.0, 0.0
    %v1904 = vsel %vm1840, 1.0, 0.0
    %v1905 = vsel %vm1841, 1.0, 0.0
    %v1906 = vsel %vm1842, 1.0, 0.0
    %v1907 = vsel %vm1843, 1.0, 0.0
    %v1908 = vsel %vm1844, 1.0, 0.0
    %v1909 = vsel %vm1845, 1.0, 0.0
    %v1910 = vsel %vm1846, 1.0, 0.0
    %v1911 = vsel %vm1847, 1.0, 0.0
    %v1912 = vsel %vm1848, 1.0, 0.0
    %v1913 = vsel %vm1849, 1.0, 0.0
    %v1914 = vsel %vm1850, 1.0, 0.0
    %v1915 = vsel %vm1851, 1.0, 0.0
    %v1916 = vsel %vm1852, 1.0, 0.0
    %v1917 = vsel %vm1853, 1.0, 0.0
    %v1918 = vsel %vm1854, 1.0, 0.0
    %v1919 = vsel %vm1855, 1.0, 0.0
    %v1920 = vsel %vm1856, 1.0, 0.0
    %v1921 = vsel %vm1857, 1.0, 0.0
    %v1922 = vsel %vm1858, 1.0, 0.0
    %v1923 = vsel %vm1859, 1.0, 0.0
    %v1924 = vsel %vm1860, 1.0, 0.0
    %v1925 = vsel %vm1861, 1.0, 0.0
    %v1926 = vsel %vm1862, 1.0, 0.0
    %v1927 = vsel %vm1863, 1.0, 0.0
    %v1928 = vsel %vm1864, 1.0, 0.0
    %v1929 = vsel %vm1865, 1.0, 0.0
    %v1930 = vsel %vm1866, 1.0, 0.0
    %v1931 = vsel %vm1867, 1.0, 0.0
    %v1932 = vsel %vm1868, 1.0, 0.0
    %v1933 = vsel %vm1869, 1.0, 0.0
    %v1934 = vsel %vm1870, 1.0, 0.0
    %v1935 = vsel %vm1871, 1.0, 0.0
    %v1936 = vsel %vm1872, 1.0, 0.0
    %v1937 = vsel %vm1873, 1.0, 0.0
    %v1938 = vsel %vm1874, 1.0, 0.0
    %v1939 = vsel %vm1875, 1.0, 0.0
    %v1940 = vsel %vm1876, 1.0, 0.0
    %v1941 = vsel %vm1877, 1.0, 0.0
    %v1942 = vsel %vm1878, 1.0, 0.0
    %v1943 = vsel %vm1879, 1.0, 0.0
    %v1944 = vsel %vm1880, 1.0, 0.0
    %v1945 = vsel %vm1881, 1.0, 0.0
    %v1946 = vsel %vm1882, 1.0, 0.0
    %v1947 = vsel %vm1883, 1.0, 0.0
    %v1948 = vsel %vm1884, 1.0, 0.0
    %v1949 = vsel %vm1885, 1.0, 0.0
    %v1950 = vsel %vm1886, 1.0, 0.0
    %v1951 = vsel %vm1887, 1.0, 0.0
    %v1952 = vsel %vm1888, 1.0, 0.0
    %v1953 = vsel %vm1889, 1.0, 0.0
    %v1954 = vsel %vm1890, 1.0, 0.0
    %v1955 = vsel %vm1891, 1.0, 0.0
    %v1956 = vsel %vm1892, 1.0, 0.0
    %v1957 = vsel %vm1893, 1.0, 0.0
    %v1958 = vsel %vm1894, 1.0, 0.0
    %v1959 = vsel %vm1895, 1.0, 0.0
    %v1960 = vsel %vm1896, 1.0, 0.0
    %v1961 = vsel %vm1897, 1.0, 0.0
    %v1962 = vsel %vm1898, 1.0, 0.0
    %v1963 = vsel %vm1899, 1.0, 0.0
    %v1964 = vsel %vm1900, 1.0, 0.0
    %v1965 = vsel %vm1901, 1.0, 0.0
    %v1966 = vadd.f32 %v1774, 0.78539
    %v1967 = vadd.f32 %v1775, 0.78539
    %v1968 = vadd.f32 %v1776, 0.78539
    %v1969 = vadd.f32 %v1777, 0.78539
    %v1970 = vadd.f32 %v1778, 0.78539
    %v1971 = vadd.f32 %v1779, 0.78539
    %v1972 = vadd.f32 %v1780, 0.78539
    %v1973 = vadd.f32 %v1781, 0.78539
    %v1974 = vadd.f32 %v1782, 0.78539
    %v1975 = vadd.f32 %v1783, 0.78539
    %v1976 = vadd.f32 %v1784, 0.78539
    %v1977 = vadd.f32 %v1785, 0.78539
    %v1978 = vadd.f32 %v1786, 0.78539
    %v1979 = vadd.f32 %v1787, 0.78539
    %v1980 = vadd.f32 %v1788, 0.78539
    %v1981 = vadd.f32 %v1789, 0.78539
    %v1982 = vadd.f32 %v1790, 0.78539
    %v1983 = vadd.f32 %v1791, 0.78539
    %v1984 = vadd.f32 %v1792, 0.78539
    %v1985 = vadd.f32 %v1793, 0.78539
    %v1986 = vadd.f32 %v1794, 0.78539
    %v1987 = vadd.f32 %v1795, 0.78539
    %v1988 = vadd.f32 %v1796, 0.78539
    %v1989 = vadd.f32 %v1797, 0.78539
    %v1990 = vadd.f32 %v1798, 0.78539
    %v1991 = vadd.f32 %v1799, 0.78539
    %v1992 = vadd.f32 %v1800, 0.78539
    %v1993 = vadd.f32 %v1801, 0.78539
    %v1994 = vadd.f32 %v1802, 0.78539
    %v1995 = vadd.f32 %v1803, 0.78539
    %v1996 = vadd.f32 %v1804, 0.78539
    %v1997 = vadd.f32 %v1805, 0.78539
    %v1998 = vadd.f32 %v1806, 0.78539
    %v1999 = vadd.f32 %v1807, 0.78539
    %v2000 = vadd.f32 %v1808, 0.78539
    %v2001 = vadd.f32 %v1809, 0.78539
    %v2002 = vadd.f32 %v1810, 0.78539
    %v2003 = vadd.f32 %v1811, 0.78539
    %v2004 = vadd.f32 %v1812, 0.78539
    %v2005 = vadd.f32 %v1813, 0.78539
    %v2006 = vadd.f32 %v1814, 0.78539
    %v2007 = vadd.f32 %v1815, 0.78539
    %v2008 = vadd.f32 %v1816, 0.78539
    %v2009 = vadd.f32 %v1817, 0.78539
    %v2010 = vadd.f32 %v1818, 0.78539
    %v2011 = vadd.f32 %v1819, 0.78539
    %v2012 = vadd.f32 %v1820, 0.78539
    %v2013 = vadd.f32 %v1821, 0.78539
    %v2014 = vadd.f32 %v1822, 0.78539
    %v2015 = vadd.f32 %v1823, 0.78539
    %v2016 = vadd.f32 %v1824, 0.78539
    %v2017 = vadd.f32 %v1825, 0.78539
    %v2018 = vadd.f32 %v1826, 0.78539
    %v2019 = vadd.f32 %v1827, 0.78539
    %v2020 = vadd.f32 %v1828, 0.78539
    %v2021 = vadd.f32 %v1829, 0.78539
    %v2022 = vadd.f32 %v1830, 0.78539
    %v2023 = vadd.f32 %v1831, 0.78539
    %v2024 = vadd.f32 %v1832, 0.78539
    %v2025 = vadd.f32 %v1833, 0.78539
    %v2026 = vadd.f32 %v1834, 0.78539
    %v2027 = vadd.f32 %v1835, 0.78539
    %v2028 = vadd.f32 %v1836, 0.78539
    %v2029 = vadd.f32 %v1837, 0.78539
    %v2030 = vmul.f32 %v1902, 3.1415927
    %v2031 = vmul.f32 %v1903, 3.1415927
    %v2032 = vmul.f32 %v1904, 3.1415927
    %v2033 = vmul.f32 %v1905, 3.1415927
    %v2034 = vmul.f32 %v1906, 3.1415927
    %v2035 = vmul.f32 %v1907, 3.1415927
    %v2036 = vmul.f32 %v1908, 3.1415927
    %v2037 = vmul.f32 %v1909, 3.1415927
    %v2038 = vmul.f32 %v1910, 3.1415927
    %v2039 = vmul.f32 %v1911, 3.1415927
    %v2040 = vmul.f32 %v1912, 3.1415927
    %v2041 = vmul.f32 %v1913, 3.1415927
    %v2042 = vmul.f32 %v1914, 3.1415927
    %v2043 = vmul.f32 %v1915, 3.1415927
    %v2044 = vmul.f32 %v1916, 3.1415927
    %v2045 = vmul.f32 %v1917, 3.1415927
    %v2046 = vmul.f32 %v1918, 3.1415927
    %v2047 = vmul.f32 %v1919, 3.1415927
    %v2048 = vmul.f32 %v1920, 3.1415927
    %v2049 = vmul.f32 %v1921, 3.1415927
    %v2050 = vmul.f32 %v1922, 3.1415927
    %v2051 = vmul.f32 %v1923, 3.1415927
    %v2052 = vmul.f32 %v1924, 3.1415927
    %v2053 = vmul.f32 %v1925, 3.1415927
    %v2054 = vmul.f32 %v1926, 3.1415927
    %v2055 = vmul.f32 %v1927, 3.1415927
    %v2056 = vmul.f32 %v1928, 3.1415927
    %v2057 = vmul.f32 %v1929, 3.1415927
    %v2058 = vmul.f32 %v1930, 3.1415927
    %v2059 = vmul.f32 %v1931, 3.1415927
    %v2060 = vmul.f32 %v1932, 3.1415927
    %v2061 = vmul.f32 %v1933, 3.1415927
    %v2062 = vmul.f32 %v1934, 3.1415927
    %v2063 = vmul.f32 %v1935, 3.1415927
    %v2064 = vmul.f32 %v1936, 3.1415927
    %v2065 = vmul.f32 %v1937, 3.1415927
    %v2066 = vmul.f32 %v1938, 3.1415927
    %v2067 = vmul.f32 %v1939, 3.1415927
    %v2068 = vmul.f32 %v1940, 3.1415927
    %v2069 = vmul.f32 %v1941, 3.1415927
    %v2070 = vmul.f32 %v1942, 3.1415927
    %v2071 = vmul.f32 %v1943, 3.1415927
    %v2072 = vmul.f32 %v1944, 3.1415927
    %v2073 = vmul.f32 %v1945, 3.1415927
    %v2074 = vmul.f32 %v1946, 3.1415927
    %v2075 = vmul.f32 %v1947, 3.1415927
    %v2076 = vmul.f32 %v1948, 3.1415927
    %v2077 = vmul.f32 %v1949, 3.1415927
    %v2078 = vmul.f32 %v1950, 3.1415927
    %v2079 = vmul.f32 %v1951, 3.1415927
    %v2080 = vmul.f32 %v1952, 3.1415927
    %v2081 = vmul.f32 %v1953, 3.1415927
    %v2082 = vmul.f32 %v1954, 3.1415927
    %v2083 = vmul.f32 %v1955, 3.1415927
    %v2084 = vmul.f32 %v1956, 3.1415927
    %v2085 = vmul.f32 %v1957, 3.1415927
    %v2086 = vmul.f32 %v1958, 3.1415927
    %v2087 = vmul.f32 %v1959, 3.1415927
    %v2088 = vmul.f32 %v1960, 3.1415927
    %v2089 = vmul.f32 %v1961, 3.1415927
    %v2090 = vmul.f32 %v1962, 3.1415927
    %v2091 = vmul.f32 %v1963, 3.1415927
    %v2092 = vmul.f32 %v1964, 3.1415927
    %v2093 = vmul.f32 %v1965, 3.1415927
    %v2094 = vadd.f32 %v1966, %v2030
    %v2095 = vadd.f32 %v1967, %v2031
    %v2096 = vadd.f32 %v1968, %v2032
    %v2097 = vadd.f32 %v1969, %v2033
    %v2098 = vadd.f32 %v1970, %v2034
    %v2099 = vadd.f32 %v1971, %v2035
    %v2100 = vadd.f32 %v1972, %v2036
    %v2101 = vadd.f32 %v1973, %v2037
    %v2102 = vadd.f32 %v1974, %v2038
    %v2103 = vadd.f32 %v1975, %v2039
    %v2104 = vadd.f32 %v1976, %v2040
    %v2105 = vadd.f32 %v1977, %v2041
    %v2106 = vadd.f32 %v1978, %v2042
    %v2107 = vadd.f32 %v1979, %v2043
    %v2108 = vadd.f32 %v1980, %v2044
    %v2109 = vadd.f32 %v1981, %v2045
    %v2110 = vadd.f32 %v1982, %v2046
    %v2111 = vadd.f32 %v1983, %v2047
    %v2112 = vadd.f32 %v1984, %v2048
    %v2113 = vadd.f32 %v1985, %v2049
    %v2114 = vadd.f32 %v1986, %v2050
    %v2115 = vadd.f32 %v1987, %v2051
    %v2116 = vadd.f32 %v1988, %v2052
    %v2117 = vadd.f32 %v1989, %v2053
    %v2118 = vadd.f32 %v1990, %v2054
    %v2119 = vadd.f32 %v1991, %v2055
    %v2120 = vadd.f32 %v1992, %v2056
    %v2121 = vadd.f32 %v1993, %v2057
    %v2122 = vadd.f32 %v1994, %v2058
    %v2123 = vadd.f32 %v1995, %v2059
    %v2124 = vadd.f32 %v1996, %v2060
    %v2125 = vadd.f32 %v1997, %v2061
    %v2126 = vadd.f32 %v1998, %v2062
    %v2127 = vadd.f32 %v1999, %v2063
    %v2128 = vadd.f32 %v2000, %v2064
    %v2129 = vadd.f32 %v2001, %v2065
    %v2130 = vadd.f32 %v2002, %v2066
    %v2131 = vadd.f32 %v2003, %v2067
    %v2132 = vadd.f32 %v2004, %v2068
    %v2133 = vadd.f32 %v2005, %v2069
    %v2134 = vadd.f32 %v2006, %v2070
    %v2135 = vadd.f32 %v2007, %v2071
    %v2136 = vadd.f32 %v2008, %v2072
    %v2137 = vadd.f32 %v2009, %v2073
    %v2138 = vadd.f32 %v2010, %v2074
    %v2139 = vadd.f32 %v2011, %v2075
    %v2140 = vadd.f32 %v2012, %v2076
    %v2141 = vadd.f32 %v2013, %v2077
    %v2142 = vadd.f32 %v2014, %v2078
    %v2143 = vadd.f32 %v2015, %v2079
    %v2144 = vadd.f32 %v2016, %v2080
    %v2145 = vadd.f32 %v2017, %v2081
    %v2146 = vadd.f32 %v2018, %v2082
    %v2147 = vadd.f32 %v2019, %v2083
    %v2148 = vadd.f32 %v2020, %v2084
    %v2149 = vadd.f32 %v2021, %v2085
    %v2150 = vadd.f32 %v2022, %v2086
    %v2151 = vadd.f32 %v2023, %v2087
    %v2152 = vadd.f32 %v2024, %v2088
    %v2153 = vadd.f32 %v2025, %v2089
    %v2154 = vadd.f32 %v2026, %v2090
    %v2155 = vadd.f32 %v2027, %v2091
    %v2156 = vadd.f32 %v2028, %v2092
    %v2157 = vadd.f32 %v2029, %v2093
    %v2158 = vsel %vm1069, %v2094, %v1390
    %v2159 = vsel %vm1069, %v2095, %v1391
    %v2160 = vsel %vm1069, %v2096, %v1392
    %v2161 = vsel %vm1069, %v2097, %v1393
    %v2162 = vsel %vm1069, %v2098, %v1394
    %v2163 = vsel %vm1069, %v2099, %v1395
    %v2164 = vsel %vm1069, %v2100, %v1396
    %v2165 = vsel %vm1069, %v2101, %v1397
    %v2166 = vsel %vm1069, %v2102, %v1398
    %v2167 = vsel %vm1069, %v2103, %v1399
    %v2168 = vsel %vm1069, %v2104, %v1400
    %v2169 = vsel %vm1069, %v2105, %v1401
    %v2170 = vsel %vm1069, %v2106, %v1402
    %v2171 = vsel %vm1069, %v2107, %v1403
    %v2172 = vsel %vm1069, %v2108, %v1404
    %v2173 = vsel %vm1069, %v2109, %v1405
    %v2174 = vsel %vm1069, %v2110, %v1406
    %v2175 = vsel %vm1069, %v2111, %v1407
    %v2176 = vsel %vm1069, %v2112, %v1408
    %v2177 = vsel %vm1069, %v2113, %v1409
    %v2178 = vsel %vm1069, %v2114, %v1410
    %v2179 = vsel %vm1069, %v2115, %v1411
    %v2180 = vsel %vm1069, %v2116, %v1412
    %v2181 = vsel %vm1069, %v2117, %v1413
    %v2182 = vsel %vm1069, %v2118, %v1414
    %v2183 = vsel %vm1069, %v2119, %v1415
    %v2184 = vsel %vm1069, %v2120, %v1416
    %v2185 = vsel %vm1069, %v2121, %v1417
    %v2186 = vsel %vm1069, %v2122, %v1418
    %v2187 = vsel %vm1069, %v2123, %v1419
    %v2188 = vsel %vm1069, %v2124, %v1420
    %v2189 = vsel %vm1069, %v2125, %v1421
    %v2190 = vsel %vm1069, %v2126, %v1422
    %v2191 = vsel %vm1069, %v2127, %v1423
    %v2192 = vsel %vm1069, %v2128, %v1424
    %v2193 = vsel %vm1069, %v2129, %v1425
    %v2194 = vsel %vm1069, %v2130, %v1426
    %v2195 = vsel %vm1069, %v2131, %v1427
    %v2196 = vsel %vm1069, %v2132, %v1428
    %v2197 = vsel %vm1069, %v2133, %v1429
    %v2198 = vsel %vm1069, %v2134, %v1430
    %v2199 = vsel %vm1069, %v2135, %v1431
    %v2200 = vsel %vm1069, %v2136, %v1432
    %v2201 = vsel %vm1069, %v2137, %v1433
    %v2202 = vsel %vm1069, %v2138, %v1434
    %v2203 = vsel %vm1069, %v2139, %v1435
    %v2204 = vsel %vm1069, %v2140, %v1436
    %v2205 = vsel %vm1069, %v2141, %v1437
    %v2206 = vsel %vm1069, %v2142, %v1438
    %v2207 = vsel %vm1069, %v2143, %v1439
    %v2208 = vsel %vm1069, %v2144, %v1440
    %v2209 = vsel %vm1069, %v2145, %v1441
    %v2210 = vsel %vm1069, %v2146, %v1442
    %v2211 = vsel %vm1069, %v2147, %v1443
    %v2212 = vsel %vm1069, %v2148, %v1444
    %v2213 = vsel %vm1069, %v2149, %v1445
    %v2214 = vsel %vm1069, %v2150, %v1446
    %v2215 = vsel %vm1069, %v2151, %v1447
    %v2216 = vsel %vm1069, %v2152, %v1448
    %v2217 = vsel %vm1069, %v2153, %v1449
    %v2218 = vsel %vm1069, %v2154, %v1450
    %v2219 = vsel %vm1069, %v2155, %v1451
    %v2220 = vsel %vm1069, %v2156, %v1452
    %v2221 = vsel %vm1069, %v2157, %v1453
    %2222 = vst [vmem:[%s7] sm:$0xff] %v2158
    %2223 = vst [vmem:[%s7 + $0x8] sm:$0xff] %v2159
    %2224 = vst [vmem:[%s7 + $0x10] sm:$0xff] %v2160
    %2225 = vst [vmem:[%s7 + $0x18] sm:$0xff] %v2161
    %2226 = vst [vmem:[%s7 + $0x20] sm:$0xff] %v2162
    %2227 = vst [vmem:[%s7 + $0x28] sm:$0xff] %v2163
    %2228 = vst [vmem:[%s7 + $0x30] sm:$0xff] %v2164
    %2229 = vst [vmem:[%s7 + $0x38] sm:$0xff] %v2165
    %2230 = vst [vmem:[%s7 + $0x40] sm:$0xff] %v2166
    %2231 = vst [vmem:[%s7 + $0x48] sm:$0xff] %v2167
    %2232 = vst [vmem:[%s7 + $0x50] sm:$0xff] %v2168
    %2233 = vst [vmem:[%s7 + $0x58] sm:$0xff] %v2169
    %2234 = vst [vmem:[%s7 + $0x60] sm:$0xff] %v2170
    %2235 = vst [vmem:[%s7 + $0x68] sm:$0xff] %v2171
    %2236 = vst [vmem:[%s7 + $0x70] sm:$0xff] %v2172
    %2237 = vst [vmem:[%s7 + $0x78] sm:$0xff] %v2173
    %2238 = vst [vmem:[%s7 + $0x80] sm:$0xff] %v2174
    %2239 = vst [vmem:[%s7 + $0x88] sm:$0xff] %v2175
    %2240 = vst [vmem:[%s7 + $0x90] sm:$0xff] %v2176
    %2241 = vst [vmem:[%s7 + $0x98] sm:$0xff] %v2177
    %2242 = vst [vmem:[%s7 + $0xa0] sm:$0xff] %v2178
    %2243 = vst [vmem:[%s7 + $0xa8] sm:$0xff] %v2179
    %2244 = vst [vmem:[%s7 + $0xb0] sm:$0xff] %v2180
    %2245 = vst [vmem:[%s7 + $0xb8] sm:$0xff] %v2181
    %2246 = vst [vmem:[%s7 + $0xc0] sm:$0xff] %v2182
    %2247 = vst [vmem:[%s7 + $0xc8] sm:$0xff] %v2183
    %2248 = vst [vmem:[%s7 + $0xd0] sm:$0xff] %v2184
    %2249 = vst [vmem:[%s7 + $0xd8] sm:$0xff] %v2185
    %2250 = vst [vmem:[%s7 + $0xe0] sm:$0xff] %v2186
    %2251 = vst [vmem:[%s7 + $0xe8] sm:$0xff] %v2187
    %2252 = vst [vmem:[%s7 + $0xf0] sm:$0xff] %v2188
    %2253 = vst [vmem:[%s7 + $0xf8] sm:$0xff] %v2189
    %2254 = vst [vmem:[%s7 + $0x100] sm:$0xff] %v2190
    %2255 = vst [vmem:[%s7 + $0x108] sm:$0xff] %v2191
    %2256 = vst [vmem:[%s7 + $0x110] sm:$0xff] %v2192
    %2257 = vst [vmem:[%s7 + $0x118] sm:$0xff] %v2193
    %2258 = vst [vmem:[%s7 + $0x120] sm:$0xff] %v2194
    %2259 = vst [vmem:[%s7 + $0x128] sm:$0xff] %v2195
    %2260 = vst [vmem:[%s7 + $0x130] sm:$0xff] %v2196
    %2261 = vst [vmem:[%s7 + $0x138] sm:$0xff] %v2197
    %2262 = vst [vmem:[%s7 + $0x140] sm:$0xff] %v2198
    %2263 = vst [vmem:[%s7 + $0x148] sm:$0xff] %v2199
    %2264 = vst [vmem:[%s7 + $0x150] sm:$0xff] %v2200
    %2265 = vst [vmem:[%s7 + $0x158] sm:$0xff] %v2201
    %2266 = vst [vmem:[%s7 + $0x160] sm:$0xff] %v2202
    %2267 = vst [vmem:[%s7 + $0x168] sm:$0xff] %v2203
    %2268 = vst [vmem:[%s7 + $0x170] sm:$0xff] %v2204
    %2269 = vst [vmem:[%s7 + $0x178] sm:$0xff] %v2205
    %2270 = vst [vmem:[%s7 + $0x180] sm:$0xff] %v2206
    %2271 = vst [vmem:[%s7 + $0x188] sm:$0xff] %v2207
    %2272 = vst [vmem:[%s7 + $0x190] sm:$0xff] %v2208
    %2273 = vst [vmem:[%s7 + $0x198] sm:$0xff] %v2209
    %2274 = vst [vmem:[%s7 + $0x1a0] sm:$0xff] %v2210
    %2275 = vst [vmem:[%s7 + $0x1a8] sm:$0xff] %v2211
    %2276 = vst [vmem:[%s7 + $0x1b0] sm:$0xff] %v2212
    %2277 = vst [vmem:[%s7 + $0x1b8] sm:$0xff] %v2213
    %2278 = vst [vmem:[%s7 + $0x1c0] sm:$0xff] %v2214
    %2279 = vst [vmem:[%s7 + $0x1c8] sm:$0xff] %v2215
    %2280 = vst [vmem:[%s7 + $0x1d0] sm:$0xff] %v2216
    %2281 = vst [vmem:[%s7 + $0x1d8] sm:$0xff] %v2217
    %2282 = vst [vmem:[%s7 + $0x1e0] sm:$0xff] %v2218
    %2283 = vst [vmem:[%s7 + $0x1e8] sm:$0xff] %v2219
    %2284 = vst [vmem:[%s7 + $0x1f0] sm:$0xff] %v2220
    %2285 = vst [vmem:[%s7 + $0x1f8] sm:$0xff] %v2221
    // Predicated region
    $region42: #{anchor_head_forward.1} parent=1 // pred_check
      _
    $region43: #{anchor_head_forward.1} parent=1 // pred_check_branch
      %2287 = sbr.rel (0) target = $region45
    $region44: #{anchor_head_forward.1} parent=1 // pred_region
      _
    $region45: #{anchor_head_forward.1} parent=1 // pred_fallthru
      _
    // Predicated region
    $region46: #{anchor_head_forward.1} parent=1 // pred_check
      _
    $region47: #{anchor_head_forward.1} parent=1 // pred_check_branch
      %2289 = sbr.rel (0) target = $region49
    $region48: #{anchor_head_forward.1} parent=1 // pred_region
      _
    $region49: #{anchor_head_forward.1} parent=1 // pred_fallthru
      _
    // Predicated region
    $region50: #{anchor_head_forward.1} parent=1 // pred_check
      _
    $region51: #{anchor_head_forward.1} parent=1 // pred_check_branch
      %2291 = sbr.rel (0) target = $region53
    $region52: #{anchor_head_forward.1} parent=1 // pred_region
      _
    $region53: #{anchor_head_forward.1} parent=1 // pred_fallthru
      _
    // Predicated region
    $region54: #{anchor_head_forward.1} parent=1 // pred_check
      _
    $region55: #{anchor_head_forward.1} parent=1 // pred_check_branch
      %2293 = sbr.rel (0) target = $region57
    $region56: #{anchor_head_forward.1} parent=1 // pred_region
      _
    $region57: #{anchor_head_forward.1} parent=1 // pred_fallthru
      _
    %2294 = vsyncpa [#allocation3], 1
    %2295 = vsyncpa [#allocation5], 1
    %2296 = vsyncpa [#allocation8], 1

</llo_original>
